<compile_context>
chip_gen: v7x
topology: tpu7x:2x2x1
jax: 0.10.0
libtpu: 0.0.40
codegen_flags: <defaults>
</compile_context>

<pallas_src>
import math

import jax
import jax.numpy as jnp
from jax import lax
from jax.experimental import pallas as pl
from jax.experimental.pallas import tpu as pltpu


def _round_up(n, m):
    return ((n + m - 1) // m) * m


def cnn_gru_fc_kernel(x_unf_ref, wconv_ref, bconv_ref,
                      wih_ref, bih_ref, whh_ref, bhhn_ref,
                      fcw_ref, fcb_ref, out_ref, gx_ref):
    """Fused Conv1d(im2col) + ReLU + MaxPool1d(2,2) + GRU + Linear.

    Shapes (all padded; Bp = batch padded to 8, Hp/Op padded to 128):
      x_unf_ref : (T*Bp, 3*C)   im2col rows, time-major (row = t*Bp + b), mxu dtype
      wconv_ref : (3*C, Hp)     conv weight, taps flattened, mxu dtype
      bconv_ref : (1, Hp)       f32
      wih_ref   : (Hp, 3*Hp)    W_ih^T, gate blocks 128-lane aligned, mxu dtype
      bih_ref   : (1, 3*Hp)     f32; r/z blocks of b_hh already folded in
      whh_ref   : (Hp, 3*Hp)    W_hh^T, mxu dtype
      bhhn_ref  : (1, Hp)       f32; n-block of b_hh only
      fcw_ref   : (Hp, Op)      fc W^T, mxu dtype
      fcb_ref   : (1, Op)       f32
      out_ref   : (Bp, Op)      lane-dense f32 output
      gx_ref    : (Tg, Bp, 3*Hp) f32 scratch: hoisted input-gate pre-activations
    """
    Tg, Bp, G3 = gx_ref.shape
    Hp = G3 // 3

    # --- CNN front end: Conv1d as one im2col matmul, then ReLU + MaxPool -----
    conv = jnp.dot(x_unf_ref[...], wconv_ref[...],
                   preferred_element_type=jnp.float32) + bconv_ref[...]
    conv = jnp.maximum(conv, 0.0)                         # (T*Bp, Hp), f32
    # rows are t-major: group pairs of timesteps and take the max (MaxPool 2,2)
    c = conv.reshape(Tg, 2 * Bp, Hp)                      # sublane-tile aligned
    pooled = jnp.maximum(c[:, :Bp, :], c[:, Bp:, :])      # (Tg, Bp, Hp)

    # --- GRU input projection hoisted out of the recurrence (one big matmul);
    #     r/z hh-biases were folded into bih_ref in the wrapper ---------------
    gx = jnp.dot(pooled.reshape(Tg * Bp, Hp).astype(wih_ref.dtype), wih_ref[...],
                 preferred_element_type=jnp.float32) + bih_ref[...]
    gx_ref[...] = gx.reshape(Tg, Bp, G3)

    # --- serial recurrence: only h @ W_hh^T + gate math per timestep ---------
    whh = whh_ref[...]            # load once (bf16 on the fast path)
    bhh_n = bhhn_ref[...]         # (1, Hp) f32, n-block bias only

    def step(t, h):
        xg = gx_ref[t]                                    # (Bp, 3*Hp) f32
        hg = jnp.dot(h.astype(whh.dtype), whh,
                     preferred_element_type=jnp.float32)  # (Bp, 3*Hp) f32
        rz = jax.nn.sigmoid(xg[:, :2 * Hp] + hg[:, :2 * Hp])   # one EUP slab
        r = rz[:, :Hp]
        z = rz[:, Hp:]
        n = jnp.tanh(xg[:, 2 * Hp:] + r * (hg[:, 2 * Hp:] + bhh_n))
        return n + z * (h - n)                            # == (1-z)*n + z*h

    h_last = lax.fori_loop(0, Tg, step,
                           jnp.zeros((Bp, Hp), jnp.float32), unroll=True)

    # --- final linear head, lane-dense (Bp, Op) store -------------------------
    out_ref[...] = (jnp.dot(h_last.astype(fcw_ref.dtype), fcw_ref[...],
                            preferred_element_type=jnp.float32)
                    + fcb_ref[...]).astype(out_ref.dtype)


def cnn_jit_gru_predictor(x, params, *, mxu_dtype=jnp.bfloat16):
    """x: (batch, seq_len, num_features)  ->  (batch, output_size).

    mxu_dtype: dtype of MXU matmul operands (accumulation / gate math always
    f32).  bf16 is the fast path; f32 is bit-tight vs. the reference.
    """
    w_conv, b_conv, w_ih, w_hh, b_ih, b_hh, fc_w, fc_b = params
    B, T, C = x.shape
    H = w_hh.shape[1]
    O = fc_w.shape[0]
    assert T % 2 == 0, "MaxPool1d(2,2) path assumes even sequence length"
    Tg = T // 2

    Bp = _round_up(B, 8)          # full f32 sublanes
    Hp = _round_up(H, 128)        # gate boundaries on 128-lane boundaries
    Op = _round_up(O, 128)        # lane-dense output store
    f32 = jnp.float32

    # ---- im2col unfold for Conv1d(k=3, s=1, p=1): pure layout, tiny tensor ---
    xb = jnp.pad(x.astype(f32), ((0, Bp - B), (0, 0), (0, 0)))   # (Bp, T, C)
    xpd = jnp.pad(xb, ((0, 0), (1, 1), (0, 0)))                  # (Bp, T+2, C)
    x_unf = jnp.concatenate(
        [xpd[:, 0:T], xpd[:, 1:T + 1], xpd[:, 2:T + 2]], axis=-1)  # (Bp, T, 3C)
    x_unf = jnp.transpose(x_unf, (1, 0, 2)).reshape(T * Bp, 3 * C)  # t-major
    x_unf = x_unf.astype(mxu_dtype)

    # ---- pad / transpose weights so every gate block is 128-lane aligned ----
    # conv weight (H, C, 3) -> flat (3C, Hp) matching the im2col column order.
    wconv_f = jnp.transpose(w_conv.astype(f32), (2, 1, 0)).reshape(3 * C, H)
    wconv_f = jnp.pad(wconv_f, ((0, 0), (0, Hp - H))).astype(mxu_dtype)
    bconv2 = jnp.pad(b_conv.astype(f32), (0, Hp - H)).reshape(1, Hp)

    def pad_gate_mat(w, in_dim, in_pad):
        # (3H, in_dim) -> transposed (in_pad, 3*Hp) with zero-padded gate blocks
        w3 = jnp.pad(w.astype(f32).reshape(3, H, in_dim),
                     ((0, 0), (0, Hp - H), (0, in_pad - in_dim)))
        return jnp.transpose(w3.reshape(3 * Hp, in_pad)).astype(mxu_dtype)

    def pad_gate_vec(b):
        b3 = jnp.pad(b.astype(f32).reshape(3, H), ((0, 0), (0, Hp - H)))
        return b3.reshape(1, 3 * Hp)

    wih_t = pad_gate_mat(w_ih, H, Hp)     # GRU input size == H (CNN channels)
    whh_t = pad_gate_mat(w_hh, H, Hp)
    bih_full = pad_gate_vec(b_ih)                             # (1, 3Hp) f32
    bhh_full = pad_gate_vec(b_hh)                             # (1, 3Hp) f32
    # Fold the r/z blocks of b_hh into the hoisted input projection bias;
    # keep only the n-block of b_hh on the per-step path (it sits inside r*(.)).
    bih_mod = bih_full.at[:, :2 * Hp].add(bhh_full[:, :2 * Hp])
    bhh_n = bhh_full[:, 2 * Hp:]                              # (1, Hp) f32

    fcw_t = jnp.transpose(
        jnp.pad(fc_w.astype(f32), ((0, Op - O), (0, Hp - H)))).astype(mxu_dtype)
    fcb2 = jnp.pad(fc_b.astype(f32), (0, Op - O)).reshape(1, Op)

    vmem_spec = lambda: pl.BlockSpec(memory_space=pltpu.MemorySpace.VMEM)
    out = pl.pallas_call(
        cnn_gru_fc_kernel,
        out_shape=jax.ShapeDtypeStruct((Bp, Op), f32),
        in_specs=[vmem_spec() for _ in range(9)],
        out_specs=vmem_spec(),
        scratch_shapes=[pltpu.VMEM((Tg, Bp, 3 * Hp), f32)],
    )(x_unf, wconv_f, bconv2, wih_t, bih_mod, whh_t, bhh_n, fcw_t, fcb2)

    return out[:B, :O].astype(x.dtype)


def reference_forward(x, params):
    """Pure-JAX reference mirroring CNNJitGRU_Predictor.forward."""
    w_conv, b_conv, w_ih, w_hh, b_ih, b_hh, fc_w, fc_b = params
    B, T, C = x.shape
    H = w_hh.shape[1]
    xpd = jnp.pad(x, ((0, 0), (1, 1), (0, 0)))
    conv = (jnp.einsum('btc,hc->bth', xpd[:, 0:T], w_conv[:, :, 0])
            + jnp.einsum('btc,hc->bth', xpd[:, 1:T + 1], w_conv[:, :, 1])
            + jnp.einsum('btc,hc->bth', xpd[:, 2:T + 2], w_conv[:, :, 2])
            + b_conv)
    act = jnp.maximum(conv, 0.0)
    seq = jnp.maximum(act[:, 0::2, :], act[:, 1::2, :])   # MaxPool1d(2,2)
    h = jnp.zeros((B, H), jnp.float32)
    for t in range(T // 2):
        x_res = seq[:, t, :] @ w_ih.T + b_ih
        h_res = h @ w_hh.T + b_hh
        i_r, i_z, i_n = jnp.split(x_res, 3, axis=1)
        h_r, h_z, h_n = jnp.split(h_res, 3, axis=1)
        r = jax.nn.sigmoid(i_r + h_r)
        z = jax.nn.sigmoid(i_z + h_z)
        n = jnp.tanh(i_n + r * h_n)
        h = n - n * z + z * h
    return h @ fc_w.T + fc_b


def init_params(key, num_features, hidden_size, output_size):
    """Deterministic init mirroring the PyTorch module's default inits."""
    ks = jax.random.split(key, 8)
    u = lambda k, shape, s: jax.random.uniform(k, shape, jnp.float32, -s, s)
    conv_bound = 1.0 / math.sqrt(num_features * 3)
    w_conv = u(ks[0], (hidden_size, num_features, 3), conv_bound)
    b_conv = u(ks[1], (hidden_size,), conv_bound)
    stdv = 1.0 / math.sqrt(hidden_size)
    w_ih = u(ks[2], (3 * hidden_size, hidden_size), stdv)  # GRU input == hidden
    w_hh = u(ks[3], (3 * hidden_size, hidden_size), stdv)
    b_ih = u(ks[4], (3 * hidden_size,), stdv)
    b_hh = u(ks[5], (3 * hidden_size,), stdv)
    fc_bound = 1.0 / math.sqrt(hidden_size)
    fc_w = u(ks[6], (output_size, hidden_size), fc_bound)
    fc_b = u(ks[7], (output_size,), fc_bound)
    return (w_conv, b_conv, w_ih, w_hh, b_ih, b_hh, fc_w, fc_b)


if __name__ == "__main__":
    # Small shapes consistent with the module's forward:
    #   batch=2, seq_len=16, features(channels)=4, hidden=32, output=16
    B, T, C, H, O = 2, 16, 4, 32, 16

    key = jax.random.PRNGKey(0)
    k_x, k_p = jax.random.split(key)
    x = jax.random.normal(k_x, (B, T, C), jnp.float32)
    params = init_params(k_p, C, H, O)

    ref = reference_forward(x, params)

    # Exact path (f32 MXU operands): tight check of the fused kernel semantics.
    out_f32 = jax.block_until_ready(
        cnn_jit_gru_predictor(x, params, mxu_dtype=jnp.float32))
    assert out_f32.shape == (B, O)
    assert jnp.allclose(out_f32, ref, rtol=1e-4, atol=1e-4), \
        "f32 kernel mismatch vs reference"

    # Fast path (bf16 MXU operands, f32 accumulate + f32 gate math): the
    # production configuration; bf16 mantissa over Tg steps needs a looser
    # tolerance (per the review's correctness note).
    out_bf16 = jax.block_until_ready(
        cnn_jit_gru_predictor(x, params, mxu_dtype=jnp.bfloat16))
    assert out_bf16.shape == (B, O)
    assert jnp.allclose(out_bf16, ref, rtol=5e-2, atol=5e-2), \
        "bf16 kernel mismatch vs reference"

    print("KERNEL_OK")
</pallas_src>

<mosaic_0001>
module attributes {stable_mosaic.version = 11 : i64} {
  func.func @cnn_gru_fc_kernel(%arg0: memref<128x12xf32, #tpu.memory_space<vmem>>, %arg1: memref<12x128xf32, #tpu.memory_space<vmem>>, %arg2: memref<1x128xf32, #tpu.memory_space<vmem>>, %arg3: memref<128x384xf32, #tpu.memory_space<vmem>>, %arg4: memref<1x384xf32, #tpu.memory_space<vmem>>, %arg5: memref<128x384xf32, #tpu.memory_space<vmem>>, %arg6: memref<1x128xf32, #tpu.memory_space<vmem>>, %arg7: memref<128x128xf32, #tpu.memory_space<vmem>>, %arg8: memref<1x128xf32, #tpu.memory_space<vmem>>, %arg9: memref<8x128xf32, #tpu.memory_space<vmem>>, %arg10: memref<8x8x384xf32, #tpu.memory_space<vmem>>) attributes {dimension_semantics = [], scalar_prefetch = 0 : i64, scratch_operands = 1 : i64, tpu.core_type = #tpu.core_type<tc>} {
    %c0 = arith.constant 0 : index
    %c0_0 = arith.constant 0 : index
    %0 = vector.load %arg0[%c0, %c0_0] : memref<128x12xf32, #tpu.memory_space<vmem>>, vector<128x12xf32>
    %c0_1 = arith.constant 0 : index
    %c0_2 = arith.constant 0 : index
    %1 = vector.load %arg1[%c0_1, %c0_2] : memref<12x128xf32, #tpu.memory_space<vmem>>, vector<12x128xf32>
    %cst = arith.constant dense<0.000000e+00> : vector<128x128xf32>
    %2 = tpu.matmul %0, %1, %cst {dimension_numbers = #tpu.dot_dimension_numbers<[1], [0], [0], [1], [0, 0, 1, 1], [], []>} : vector<128x12xf32>, vector<12x128xf32>, vector<128x128xf32> -> vector<128x128xf32>
    %c0_3 = arith.constant 0 : index
    %c0_4 = arith.constant 0 : index
    %3 = vector.load %arg2[%c0_3, %c0_4] : memref<1x128xf32, #tpu.memory_space<vmem>>, vector<1x128xf32>
    %4 = vector.broadcast %3 : vector<1x128xf32> to vector<128x128xf32>
    %5 = arith.addf %2, %4 : vector<128x128xf32>
    %cst_5 = arith.constant 0.000000e+00 : f32
    %6 = vector.broadcast %cst_5 : f32 to vector<128x128xf32>
    %7 = arith.maximumf %5, %6 : vector<128x128xf32>
    %8 = vector.shape_cast %7 : vector<128x128xf32> to vector<8x16x128xf32>
    %9 = vector.extract_strided_slice %8 {offsets = [0, 0, 0], sizes = [8, 8, 128], strides = [1, 1, 1]} : vector<8x16x128xf32> to vector<8x8x128xf32>
    %10 = vector.extract_strided_slice %8 {offsets = [0, 8, 0], sizes = [8, 8, 128], strides = [1, 1, 1]} : vector<8x16x128xf32> to vector<8x8x128xf32>
    %11 = arith.maximumf %9, %10 : vector<8x8x128xf32>
    %12 = vector.shape_cast %11 : vector<8x8x128xf32> to vector<64x128xf32>
    %c0_6 = arith.constant 0 : index
    %c0_7 = arith.constant 0 : index
    %13 = vector.load %arg3[%c0_6, %c0_7] : memref<128x384xf32, #tpu.memory_space<vmem>>, vector<128x384xf32>
    %cst_8 = arith.constant dense<0.000000e+00> : vector<64x384xf32>
    %14 = tpu.matmul %12, %13, %cst_8 {dimension_numbers = #tpu.dot_dimension_numbers<[1], [0], [0], [1], [0, 0, 1, 1], [], []>} : vector<64x128xf32>, vector<128x384xf32>, vector<64x384xf32> -> vector<64x384xf32>
    %c0_9 = arith.constant 0 : index
    %c0_10 = arith.constant 0 : index
    %15 = vector.load %arg4[%c0_9, %c0_10] : memref<1x384xf32, #tpu.memory_space<vmem>>, vector<1x384xf32>
    %16 = vector.broadcast %15 : vector<1x384xf32> to vector<64x384xf32>
    %17 = arith.addf %14, %16 : vector<64x384xf32>
    %18 = vector.shape_cast %17 : vector<64x384xf32> to vector<8x8x384xf32>
    %c0_11 = arith.constant 0 : index
    %c0_12 = arith.constant 0 : index
    %c0_13 = arith.constant 0 : index
    %19 = vector.load %arg10[%c0_11, %c0_12, %c0_13] : memref<8x8x384xf32, #tpu.memory_space<vmem>>, vector<8x8x384xf32>
    tpu.vector_store %arg10[%c0_11, %c0_12, %c0_13], %18 {strides = array<i32>} : memref<8x8x384xf32, #tpu.memory_space<vmem>>, vector<8x8x384xf32>,
    %c0_14 = arith.constant 0 : index
    %c0_15 = arith.constant 0 : index
    %20 = vector.load %arg5[%c0_14, %c0_15] : memref<128x384xf32, #tpu.memory_space<vmem>>, vector<128x384xf32>
    %c0_16 = arith.constant 0 : index
    %c0_17 = arith.constant 0 : index
    %21 = vector.load %arg6[%c0_16, %c0_17] : memref<1x128xf32, #tpu.memory_space<vmem>>, vector<1x128xf32>
    %cst_18 = arith.constant 0.000000e+00 : f32
    %22 = vector.broadcast %cst_18 : f32 to vector<8x128xf32>
    %c0_i32 = arith.constant 0 : i32
    %23 = arith.index_cast %c0_i32 : i32 to index
    %c0_19 = arith.constant 0 : index
    %c0_20 = arith.constant 0 : index
    %24 = vector.load %arg10[%23, %c0_19, %c0_20] : memref<8x8x384xf32, #tpu.memory_space<vmem>>, vector<1x8x384xf32>
    %25 = vector.shape_cast %24 : vector<1x8x384xf32> to vector<8x384xf32>
    %cst_21 = arith.constant dense<0.000000e+00> : vector<8x384xf32>
    %26 = tpu.matmul %22, %20, %cst_21 {dimension_numbers = #tpu.dot_dimension_numbers<[1], [0], [0], [1], [0, 0, 1, 1], [], []>} : vector<8x128xf32>, vector<128x384xf32>, vector<8x384xf32> -> vector<8x384xf32>
    %27 = vector.extract_strided_slice %25 {offsets = [0, 0], sizes = [8, 256], strides = [1, 1]} : vector<8x384xf32> to vector<8x256xf32>
    %28 = vector.extract_strided_slice %26 {offsets = [0, 0], sizes = [8, 256], strides = [1, 1]} : vector<8x384xf32> to vector<8x256xf32>
    %29 = arith.addf %27, %28 : vector<8x256xf32>
    %30 = arith.negf %29 : vector<8x256xf32>
    %31 = math.exp %30 : vector<8x256xf32>
    %cst_22 = arith.constant 1.000000e+00 : f32
    %32 = vector.broadcast %cst_22 : f32 to vector<8x256xf32>
    %33 = arith.addf %32, %31 : vector<8x256xf32>
    %34 = arith.divf %32, %33 : vector<8x256xf32>
    %35 = vector.extract_strided_slice %34 {offsets = [0, 0], sizes = [8, 128], strides = [1, 1]} : vector<8x256xf32> to vector<8x128xf32>
    %36 = vector.extract_strided_slice %34 {offsets = [0, 128], sizes = [8, 128], strides = [1, 1]} : vector<8x256xf32> to vector<8x128xf32>
    %37 = vector.extract_strided_slice %25 {offsets = [0, 256], sizes = [8, 128], strides = [1, 1]} : vector<8x384xf32> to vector<8x128xf32>
    %38 = vector.extract_strided_slice %26 {offsets = [0, 256], sizes = [8, 128], strides = [1, 1]} : vector<8x384xf32> to vector<8x128xf32>
    %39 = vector.broadcast %21 : vector<1x128xf32> to vector<8x128xf32>
    %40 = arith.addf %38, %39 : vector<8x128xf32>
    %41 = arith.mulf %35, %40 : vector<8x128xf32>
    %42 = arith.addf %37, %41 : vector<8x128xf32>
    %43 = math.tanh %42 : vector<8x128xf32>
    %44 = arith.subf %22, %43 : vector<8x128xf32>
    %45 = arith.mulf %36, %44 : vector<8x128xf32>
    %46 = arith.addf %43, %45 : vector<8x128xf32>
    %c1_i32 = arith.constant 1 : i32
    %47 = arith.index_cast %c1_i32 : i32 to index
    %c0_23 = arith.constant 0 : index
    %c0_24 = arith.constant 0 : index
    %48 = vector.load %arg10[%47, %c0_23, %c0_24] : memref<8x8x384xf32, #tpu.memory_space<vmem>>, vector<1x8x384xf32>
    %49 = vector.shape_cast %48 : vector<1x8x384xf32> to vector<8x384xf32>
    %cst_25 = arith.constant dense<0.000000e+00> : vector<8x384xf32>
    %50 = tpu.matmul %46, %20, %cst_25 {dimension_numbers = #tpu.dot_dimension_numbers<[1], [0], [0], [1], [0, 0, 1, 1], [], []>} : vector<8x128xf32>, vector<128x384xf32>, vector<8x384xf32> -> vector<8x384xf32>
    %51 = vector.extract_strided_slice %49 {offsets = [0, 0], sizes = [8, 256], strides = [1, 1]} : vector<8x384xf32> to vector<8x256xf32>
    %52 = vector.extract_strided_slice %50 {offsets = [0, 0], sizes = [8, 256], strides = [1, 1]} : vector<8x384xf32> to vector<8x256xf32>
    %53 = arith.addf %51, %52 : vector<8x256xf32>
    %54 = arith.negf %53 : vector<8x256xf32>
    %55 = math.exp %54 : vector<8x256xf32>
    %cst_26 = arith.constant 1.000000e+00 : f32
    %56 = vector.broadcast %cst_26 : f32 to vector<8x256xf32>
    %57 = arith.addf %56, %55 : vector<8x256xf32>
    %58 = arith.divf %56, %57 : vector<8x256xf32>
    %59 = vector.extract_strided_slice %58 {offsets = [0, 0], sizes = [8, 128], strides = [1, 1]} : vector<8x256xf32> to vector<8x128xf32>
    %60 = vector.extract_strided_slice %58 {offsets = [0, 128], sizes = [8, 128], strides = [1, 1]} : vector<8x256xf32> to vector<8x128xf32>
    %61 = vector.extract_strided_slice %49 {offsets = [0, 256], sizes = [8, 128], strides = [1, 1]} : vector<8x384xf32> to vector<8x128xf32>
    %62 = vector.extract_strided_slice %50 {offsets = [0, 256], sizes = [8, 128], strides = [1, 1]} : vector<8x384xf32> to vector<8x128xf32>
    %63 = vector.broadcast %21 : vector<1x128xf32> to vector<8x128xf32>
    %64 = arith.addf %62, %63 : vector<8x128xf32>
    %65 = arith.mulf %59, %64 : vector<8x128xf32>
    %66 = arith.addf %61, %65 : vector<8x128xf32>
    %67 = math.tanh %66 : vector<8x128xf32>
    %68 = arith.subf %46, %67 : vector<8x128xf32>
    %69 = arith.mulf %60, %68 : vector<8x128xf32>
    %70 = arith.addf %67, %69 : vector<8x128xf32>
    %c2_i32 = arith.constant 2 : i32
    %71 = arith.index_cast %c2_i32 : i32 to index
    %c0_27 = arith.constant 0 : index
    %c0_28 = arith.constant 0 : index
    %72 = vector.load %arg10[%71, %c0_27, %c0_28] : memref<8x8x384xf32, #tpu.memory_space<vmem>>, vector<1x8x384xf32>
    %73 = vector.shape_cast %72 : vector<1x8x384xf32> to vector<8x384xf32>
    %cst_29 = arith.constant dense<0.000000e+00> : vector<8x384xf32>
    %74 = tpu.matmul %70, %20, %cst_29 {dimension_numbers = #tpu.dot_dimension_numbers<[1], [0], [0], [1], [0, 0, 1, 1], [], []>} : vector<8x128xf32>, vector<128x384xf32>, vector<8x384xf32> -> vector<8x384xf32>
    %75 = vector.extract_strided_slice %73 {offsets = [0, 0], sizes = [8, 256], strides = [1, 1]} : vector<8x384xf32> to vector<8x256xf32>
    %76 = vector.extract_strided_slice %74 {offsets = [0, 0], sizes = [8, 256], strides = [1, 1]} : vector<8x384xf32> to vector<8x256xf32>
    %77 = arith.addf %75, %76 : vector<8x256xf32>
    %78 = arith.negf %77 : vector<8x256xf32>
    %79 = math.exp %78 : vector<8x256xf32>
    %cst_30 = arith.constant 1.000000e+00 : f32
    %80 = vector.broadcast %cst_30 : f32 to vector<8x256xf32>
    %81 = arith.addf %80, %79 : vector<8x256xf32>
    %82 = arith.divf %80, %81 : vector<8x256xf32>
    %83 = vector.extract_strided_slice %82 {offsets = [0, 0], sizes = [8, 128], strides = [1, 1]} : vector<8x256xf32> to vector<8x128xf32>
    %84 = vector.extract_strided_slice %82 {offsets = [0, 128], sizes = [8, 128], strides = [1, 1]} : vector<8x256xf32> to vector<8x128xf32>
    %85 = vector.extract_strided_slice %73 {offsets = [0, 256], sizes = [8, 128], strides = [1, 1]} : vector<8x384xf32> to vector<8x128xf32>
    %86 = vector.extract_strided_slice %74 {offsets = [0, 256], sizes = [8, 128], strides = [1, 1]} : vector<8x384xf32> to vector<8x128xf32>
    %87 = vector.broadcast %21 : vector<1x128xf32> to vector<8x128xf32>
    %88 = arith.addf %86, %87 : vector<8x128xf32>
    %89 = arith.mulf %83, %88 : vector<8x128xf32>
    %90 = arith.addf %85, %89 : vector<8x128xf32>
    %91 = math.tanh %90 : vector<8x128xf32>
    %92 = arith.subf %70, %91 : vector<8x128xf32>
    %93 = arith.mulf %84, %92 : vector<8x128xf32>
    %94 = arith.addf %91, %93 : vector<8x128xf32>
    %c3_i32 = arith.constant 3 : i32
    %95 = arith.index_cast %c3_i32 : i32 to index
    %c0_31 = arith.constant 0 : index
    %c0_32 = arith.constant 0 : index
    %96 = vector.load %arg10[%95, %c0_31, %c0_32] : memref<8x8x384xf32, #tpu.memory_space<vmem>>, vector<1x8x384xf32>
    %97 = vector.shape_cast %96 : vector<1x8x384xf32> to vector<8x384xf32>
    %cst_33 = arith.constant dense<0.000000e+00> : vector<8x384xf32>
    %98 = tpu.matmul %94, %20, %cst_33 {dimension_numbers = #tpu.dot_dimension_numbers<[1], [0], [0], [1], [0, 0, 1, 1], [], []>} : vector<8x128xf32>, vector<128x384xf32>, vector<8x384xf32> -> vector<8x384xf32>
    %99 = vector.extract_strided_slice %97 {offsets = [0, 0], sizes = [8, 256], strides = [1, 1]} : vector<8x384xf32> to vector<8x256xf32>
    %100 = vector.extract_strided_slice %98 {offsets = [0, 0], sizes = [8, 256], strides = [1, 1]} : vector<8x384xf32> to vector<8x256xf32>
    %101 = arith.addf %99, %100 : vector<8x256xf32>
    %102 = arith.negf %101 : vector<8x256xf32>
    %103 = math.exp %102 : vector<8x256xf32>
    %cst_34 = arith.constant 1.000000e+00 : f32
    %104 = vector.broadcast %cst_34 : f32 to vector<8x256xf32>
    %105 = arith.addf %104, %103 : vector<8x256xf32>
    %106 = arith.divf %104, %105 : vector<8x256xf32>
    %107 = vector.extract_strided_slice %106 {offsets = [0, 0], sizes = [8, 128], strides = [1, 1]} : vector<8x256xf32> to vector<8x128xf32>
    %108 = vector.extract_strided_slice %106 {offsets = [0, 128], sizes = [8, 128], strides = [1, 1]} : vector<8x256xf32> to vector<8x128xf32>
    %109 = vector.extract_strided_slice %97 {offsets = [0, 256], sizes = [8, 128], strides = [1, 1]} : vector<8x384xf32> to vector<8x128xf32>
    %110 = vector.extract_strided_slice %98 {offsets = [0, 256], sizes = [8, 128], strides = [1, 1]} : vector<8x384xf32> to vector<8x128xf32>
    %111 = vector.broadcast %21 : vector<1x128xf32> to vector<8x128xf32>
    %112 = arith.addf %110, %111 : vector<8x128xf32>
    %113 = arith.mulf %107, %112 : vector<8x128xf32>
    %114 = arith.addf %109, %113 : vector<8x128xf32>
    %115 = math.tanh %114 : vector<8x128xf32>
    %116 = arith.subf %94, %115 : vector<8x128xf32>
    %117 = arith.mulf %108, %116 : vector<8x128xf32>
    %118 = arith.addf %115, %117 : vector<8x128xf32>
    %c4_i32 = arith.constant 4 : i32
    %119 = arith.index_cast %c4_i32 : i32 to index
    %c0_35 = arith.constant 0 : index
    %c0_36 = arith.constant 0 : index
    %120 = vector.load %arg10[%119, %c0_35, %c0_36] : memref<8x8x384xf32, #tpu.memory_space<vmem>>, vector<1x8x384xf32>
    %121 = vector.shape_cast %120 : vector<1x8x384xf32> to vector<8x384xf32>
    %cst_37 = arith.constant dense<0.000000e+00> : vector<8x384xf32>
    %122 = tpu.matmul %118, %20, %cst_37 {dimension_numbers = #tpu.dot_dimension_numbers<[1], [0], [0], [1], [0, 0, 1, 1], [], []>} : vector<8x128xf32>, vector<128x384xf32>, vector<8x384xf32> -> vector<8x384xf32>
    %123 = vector.extract_strided_slice %121 {offsets = [0, 0], sizes = [8, 256], strides = [1, 1]} : vector<8x384xf32> to vector<8x256xf32>
    %124 = vector.extract_strided_slice %122 {offsets = [0, 0], sizes = [8, 256], strides = [1, 1]} : vector<8x384xf32> to vector<8x256xf32>
    %125 = arith.addf %123, %124 : vector<8x256xf32>
    %126 = arith.negf %125 : vector<8x256xf32>
    %127 = math.exp %126 : vector<8x256xf32>
    %cst_38 = arith.constant 1.000000e+00 : f32
    %128 = vector.broadcast %cst_38 : f32 to vector<8x256xf32>
    %129 = arith.addf %128, %127 : vector<8x256xf32>
    %130 = arith.divf %128, %129 : vector<8x256xf32>
    %131 = vector.extract_strided_slice %130 {offsets = [0, 0], sizes = [8, 128], strides = [1, 1]} : vector<8x256xf32> to vector<8x128xf32>
    %132 = vector.extract_strided_slice %130 {offsets = [0, 128], sizes = [8, 128], strides = [1, 1]} : vector<8x256xf32> to vector<8x128xf32>
    %133 = vector.extract_strided_slice %121 {offsets = [0, 256], sizes = [8, 128], strides = [1, 1]} : vector<8x384xf32> to vector<8x128xf32>
    %134 = vector.extract_strided_slice %122 {offsets = [0, 256], sizes = [8, 128], strides = [1, 1]} : vector<8x384xf32> to vector<8x128xf32>
    %135 = vector.broadcast %21 : vector<1x128xf32> to vector<8x128xf32>
    %136 = arith.addf %134, %135 : vector<8x128xf32>
    %137 = arith.mulf %131, %136 : vector<8x128xf32>
    %138 = arith.addf %133, %137 : vector<8x128xf32>
    %139 = math.tanh %138 : vector<8x128xf32>
    %140 = arith.subf %118, %139 : vector<8x128xf32>
    %141 = arith.mulf %132, %140 : vector<8x128xf32>
    %142 = arith.addf %139, %141 : vector<8x128xf32>
    %c5_i32 = arith.constant 5 : i32
    %143 = arith.index_cast %c5_i32 : i32 to index
    %c0_39 = arith.constant 0 : index
    %c0_40 = arith.constant 0 : index
    %144 = vector.load %arg10[%143, %c0_39, %c0_40] : memref<8x8x384xf32, #tpu.memory_space<vmem>>, vector<1x8x384xf32>
    %145 = vector.shape_cast %144 : vector<1x8x384xf32> to vector<8x384xf32>
    %cst_41 = arith.constant dense<0.000000e+00> : vector<8x384xf32>
    %146 = tpu.matmul %142, %20, %cst_41 {dimension_numbers = #tpu.dot_dimension_numbers<[1], [0], [0], [1], [0, 0, 1, 1], [], []>} : vector<8x128xf32>, vector<128x384xf32>, vector<8x384xf32> -> vector<8x384xf32>
    %147 = vector.extract_strided_slice %145 {offsets = [0, 0], sizes = [8, 256], strides = [1, 1]} : vector<8x384xf32> to vector<8x256xf32>
    %148 = vector.extract_strided_slice %146 {offsets = [0, 0], sizes = [8, 256], strides = [1, 1]} : vector<8x384xf32> to vector<8x256xf32>
    %149 = arith.addf %147, %148 : vector<8x256xf32>
    %150 = arith.negf %149 : vector<8x256xf32>
    %151 = math.exp %150 : vector<8x256xf32>
    %cst_42 = arith.constant 1.000000e+00 : f32
    %152 = vector.broadcast %cst_42 : f32 to vector<8x256xf32>
    %153 = arith.addf %152, %151 : vector<8x256xf32>
    %154 = arith.divf %152, %153 : vector<8x256xf32>
    %155 = vector.extract_strided_slice %154 {offsets = [0, 0], sizes = [8, 128], strides = [1, 1]} : vector<8x256xf32> to vector<8x128xf32>
    %156 = vector.extract_strided_slice %154 {offsets = [0, 128], sizes = [8, 128], strides = [1, 1]} : vector<8x256xf32> to vector<8x128xf32>
    %157 = vector.extract_strided_slice %145 {offsets = [0, 256], sizes = [8, 128], strides = [1, 1]} : vector<8x384xf32> to vector<8x128xf32>
    %158 = vector.extract_strided_slice %146 {offsets = [0, 256], sizes = [8, 128], strides = [1, 1]} : vector<8x384xf32> to vector<8x128xf32>
    %159 = vector.broadcast %21 : vector<1x128xf32> to vector<8x128xf32>
    %160 = arith.addf %158, %159 : vector<8x128xf32>
    %161 = arith.mulf %155, %160 : vector<8x128xf32>
    %162 = arith.addf %157, %161 : vector<8x128xf32>
    %163 = math.tanh %162 : vector<8x128xf32>
    %164 = arith.subf %142, %163 : vector<8x128xf32>
    %165 = arith.mulf %156, %164 : vector<8x128xf32>
    %166 = arith.addf %163, %165 : vector<8x128xf32>
    %c6_i32 = arith.constant 6 : i32
    %167 = arith.index_cast %c6_i32 : i32 to index
    %c0_43 = arith.constant 0 : index
    %c0_44 = arith.constant 0 : index
    %168 = vector.load %arg10[%167, %c0_43, %c0_44] : memref<8x8x384xf32, #tpu.memory_space<vmem>>, vector<1x8x384xf32>
    %169 = vector.shape_cast %168 : vector<1x8x384xf32> to vector<8x384xf32>
    %cst_45 = arith.constant dense<0.000000e+00> : vector<8x384xf32>
    %170 = tpu.matmul %166, %20, %cst_45 {dimension_numbers = #tpu.dot_dimension_numbers<[1], [0], [0], [1], [0, 0, 1, 1], [], []>} : vector<8x128xf32>, vector<128x384xf32>, vector<8x384xf32> -> vector<8x384xf32>
    %171 = vector.extract_strided_slice %169 {offsets = [0, 0], sizes = [8, 256], strides = [1, 1]} : vector<8x384xf32> to vector<8x256xf32>
    %172 = vector.extract_strided_slice %170 {offsets = [0, 0], sizes = [8, 256], strides = [1, 1]} : vector<8x384xf32> to vector<8x256xf32>
    %173 = arith.addf %171, %172 : vector<8x256xf32>
    %174 = arith.negf %173 : vector<8x256xf32>
    %175 = math.exp %174 : vector<8x256xf32>
    %cst_46 = arith.constant 1.000000e+00 : f32
    %176 = vector.broadcast %cst_46 : f32 to vector<8x256xf32>
    %177 = arith.addf %176, %175 : vector<8x256xf32>
    %178 = arith.divf %176, %177 : vector<8x256xf32>
    %179 = vector.extract_strided_slice %178 {offsets = [0, 0], sizes = [8, 128], strides = [1, 1]} : vector<8x256xf32> to vector<8x128xf32>
    %180 = vector.extract_strided_slice %178 {offsets = [0, 128], sizes = [8, 128], strides = [1, 1]} : vector<8x256xf32> to vector<8x128xf32>
    %181 = vector.extract_strided_slice %169 {offsets = [0, 256], sizes = [8, 128], strides = [1, 1]} : vector<8x384xf32> to vector<8x128xf32>
    %182 = vector.extract_strided_slice %170 {offsets = [0, 256], sizes = [8, 128], strides = [1, 1]} : vector<8x384xf32> to vector<8x128xf32>
    %183 = vector.broadcast %21 : vector<1x128xf32> to vector<8x128xf32>
    %184 = arith.addf %182, %183 : vector<8x128xf32>
    %185 = arith.mulf %179, %184 : vector<8x128xf32>
    %186 = arith.addf %181, %185 : vector<8x128xf32>
    %187 = math.tanh %186 : vector<8x128xf32>
    %188 = arith.subf %166, %187 : vector<8x128xf32>
    %189 = arith.mulf %180, %188 : vector<8x128xf32>
    %190 = arith.addf %187, %189 : vector<8x128xf32>
    %c7_i32 = arith.constant 7 : i32
    %191 = arith.index_cast %c7_i32 : i32 to index
    %c0_47 = arith.constant 0 : index
    %c0_48 = arith.constant 0 : index
    %192 = vector.load %arg10[%191, %c0_47, %c0_48] : memref<8x8x384xf32, #tpu.memory_space<vmem>>, vector<1x8x384xf32>
    %193 = vector.shape_cast %192 : vector<1x8x384xf32> to vector<8x384xf32>
    %cst_49 = arith.constant dense<0.000000e+00> : vector<8x384xf32>
    %194 = tpu.matmul %190, %20, %cst_49 {dimension_numbers = #tpu.dot_dimension_numbers<[1], [0], [0], [1], [0, 0, 1, 1], [], []>} : vector<8x128xf32>, vector<128x384xf32>, vector<8x384xf32> -> vector<8x384xf32>
    %195 = vector.extract_strided_slice %193 {offsets = [0, 0], sizes = [8, 256], strides = [1, 1]} : vector<8x384xf32> to vector<8x256xf32>
    %196 = vector.extract_strided_slice %194 {offsets = [0, 0], sizes = [8, 256], strides = [1, 1]} : vector<8x384xf32> to vector<8x256xf32>
    %197 = arith.addf %195, %196 : vector<8x256xf32>
    %198 = arith.negf %197 : vector<8x256xf32>
    %199 = math.exp %198 : vector<8x256xf32>
    %cst_50 = arith.constant 1.000000e+00 : f32
    %200 = vector.broadcast %cst_50 : f32 to vector<8x256xf32>
    %201 = arith.addf %200, %199 : vector<8x256xf32>
    %202 = arith.divf %200, %201 : vector<8x256xf32>
    %203 = vector.extract_strided_slice %202 {offsets = [0, 0], sizes = [8, 128], strides = [1, 1]} : vector<8x256xf32> to vector<8x128xf32>
    %204 = vector.extract_strided_slice %202 {offsets = [0, 128], sizes = [8, 128], strides = [1, 1]} : vector<8x256xf32> to vector<8x128xf32>
    %205 = vector.extract_strided_slice %193 {offsets = [0, 256], sizes = [8, 128], strides = [1, 1]} : vector<8x384xf32> to vector<8x128xf32>
    %206 = vector.extract_strided_slice %194 {offsets = [0, 256], sizes = [8, 128], strides = [1, 1]} : vector<8x384xf32> to vector<8x128xf32>
    %207 = vector.broadcast %21 : vector<1x128xf32> to vector<8x128xf32>
    %208 = arith.addf %206, %207 : vector<8x128xf32>
    %209 = arith.mulf %203, %208 : vector<8x128xf32>
    %210 = arith.addf %205, %209 : vector<8x128xf32>
    %211 = math.tanh %210 : vector<8x128xf32>
    %212 = arith.subf %190, %211 : vector<8x128xf32>
    %213 = arith.mulf %204, %212 : vector<8x128xf32>
    %214 = arith.addf %211, %213 : vector<8x128xf32>
    %c8_i32 = arith.constant 8 : i32
    %c0_51 = arith.constant 0 : index
    %c0_52 = arith.constant 0 : index
    %215 = vector.load %arg7[%c0_51, %c0_52] : memref<128x128xf32, #tpu.memory_space<vmem>>, vector<128x128xf32>
    %cst_53 = arith.constant dense<0.000000e+00> : vector<8x128xf32>
    %216 = tpu.matmul %214, %215, %cst_53 {dimension_numbers = #tpu.dot_dimension_numbers<[1], [0], [0], [1], [0, 0, 1, 1], [], []>} : vector<8x128xf32>, vector<128x128xf32>, vector<8x128xf32> -> vector<8x128xf32>
    %c0_54 = arith.constant 0 : index
    %c0_55 = arith.constant 0 : index
    %217 = vector.load %arg8[%c0_54, %c0_55] : memref<1x128xf32, #tpu.memory_space<vmem>>, vector<1x128xf32>
    %218 = vector.broadcast %217 : vector<1x128xf32> to vector<8x128xf32>
    %219 = arith.addf %216, %218 : vector<8x128xf32>
    %c0_56 = arith.constant 0 : index
    %c0_57 = arith.constant 0 : index
    %220 = vector.load %arg9[%c0_56, %c0_57] : memref<8x128xf32, #tpu.memory_space<vmem>>, vector<8x128xf32>
    tpu.vector_store %arg9[%c0_56, %c0_57], %219 {strides = array<i32>} : memref<8x128xf32, #tpu.memory_space<vmem>>, vector<8x128xf32>,
    return
  }
}

</mosaic_0001>

<llo_original>
// kernel: tpu_custom_call.1
$region0: #{tpu_custom_call.1}
  #allocation0 [shape = 'u32[]', space=smem, size = 0x4, offset = 0x4, fixed_abs, tag = 'smem constant byte address 0x4 - core index']
  #allocation1 [shape = 'u32[144,128]{1,0:T(1,128)}', space=vmem, size = 0x12000, scoped, tag = 'internal scratch']
  #allocation2 [shape = 'f32[8,8,384]{2,1,0:T(8,128)}', space=vmem, size = 0x18000, scoped, tag = 'scratch operand']
  %s0 = inlined_call_operand.vmem [shape: f32[128,12], index: 0, kind: input, shape index: {}]
  %s1 = inlined_call_operand.vmem [shape: f32[12,128], index: 1, kind: input, shape index: {}]
  %s2 = inlined_call_operand.vmem [shape: f32[1,128], index: 2, kind: input, shape index: {}]
  %s3 = inlined_call_operand.hbm [shape: f32[128,384], index: 3, kind: input, shape index: {}]
  %s4 = inlined_call_operand.vmem [shape: f32[1,384], index: 4, kind: input, shape index: {}]
  %s5 = inlined_call_operand.hbm [shape: f32[128,384], index: 5, kind: input, shape index: {}]
  %s6 = inlined_call_operand.vmem [shape: f32[1,128], index: 6, kind: input, shape index: {}]
  %s7 = inlined_call_operand.vmem [shape: f32[128,128], index: 7, kind: input, shape index: {}]
  %s8 = inlined_call_operand.vmem [shape: f32[1,128], index: 8, kind: input, shape index: {}]
  %s9 = inlined_call_operand.hbm [shape: f32[8,128], index: 9, kind: output, shape index: {}]
  %s10 = sld [smem:[#allocation0]]
  $region54: #{tpu_custom_call.1} parent=0
    _
  %s12 = ssub.s32 1, %s10
  %s13 = scalar_select 0, %s12, %s10
  $region1: #{tpu_custom_call.1} parent=0
    #allocation3 [shape = 'u8[196608]{0}', space=vmem, size = 0x30000, scoped, tag = 'input window, operand 3, single buffered']
    #allocation4 [shape = 's32[1]{0}', space=sflag, size = 0x4, scoped, tag = 'scoped memory for tpu_custom_call.1']
    #allocation5 [shape = 's32[1]{0}', space=sflag, size = 0x4, scoped, tag = 'scoped memory for tpu_custom_call.1']
    #allocation6 [shape = 'u8[196608]{0}', space=vmem, size = 0x30000, scoped, tag = 'input window, operand 5, single buffered']
    #allocation7 [shape = 's32[1]{0}', space=sflag, size = 0x4, scoped, tag = 'scoped memory for tpu_custom_call.1']
    #allocation8 [shape = 'u8[4096]{0}', space=vmem, size = 0x1000, scoped, tag = 'output window, operand 0, single buffered']
    %14 = vsyncpa [#allocation4], 0
    %15 = vsyncpa [#allocation7], 0
    %16 = vsyncpa [#allocation5], 0
    // Predicated region
    $region2: #{tpu_custom_call.1} parent=1 // pred_check
      _
    $region3: #{tpu_custom_call.1} parent=1 // pred_check_branch
      %18 = sbr.rel (0) target = $region5
    $region4: #{tpu_custom_call.1} parent=1 // pred_region
      _
    $region5: #{tpu_custom_call.1} parent=1 // pred_fallthru
      _
    // Predicated region
    $region6: #{tpu_custom_call.1} parent=1 // pred_check
      _
    $region7: #{tpu_custom_call.1} parent=1 // pred_check_branch
      %20 = sbr.rel (0) target = $region9
    $region8: #{tpu_custom_call.1} parent=1 // pred_region
      _
    $region9: #{tpu_custom_call.1} parent=1 // pred_fallthru
      _
    // Predicated region
    $region10: #{tpu_custom_call.1} parent=1 // pred_check
      _
    $region11: #{tpu_custom_call.1} parent=1 // pred_check_branch
      %22 = sbr.rel (0) target = $region13
    $region12: #{tpu_custom_call.1} parent=1 // pred_region
      _
    $region13: #{tpu_custom_call.1} parent=1 // pred_fallthru
      _
    // Predicated region
    $region14: #{tpu_custom_call.1} parent=1 // pred_check
      _
    $region15: #{tpu_custom_call.1} parent=1 // pred_check_branch
      %24 = sbr.rel (0) target = $region17
    $region16: #{tpu_custom_call.1} parent=1 // pred_region
      %s26 = ssub.s32 6144, 6144
      %27 = vsyncadd [#allocation4], %s26
      %s28 = sshll.u32 [#allocation3], 4
      %s29 = int_to_ptr.vmem [resolvable:$true] %s28
      %34 = dma.hbm_to_vmem [thread:$0]  %s3, 6144, %s29, [#allocation4], 384, 384, 24
    $region17: #{tpu_custom_call.1} parent=1 // pred_fallthru
      _
    // Predicated region
    $region18: #{tpu_custom_call.1} parent=1 // pred_check
      _
    $region19: #{tpu_custom_call.1} parent=1 // pred_check_branch
      %36 = sbr.rel (0) target = $region21
    $region20: #{tpu_custom_call.1} parent=1 // pred_region
      _
    $region21: #{tpu_custom_call.1} parent=1 // pred_fallthru
      _
    // Predicated region
    $region22: #{tpu_custom_call.1} parent=1 // pred_check
      _
    $region23: #{tpu_custom_call.1} parent=1 // pred_check_branch
      %38 = sbr.rel (0) target = $region25
    $region24: #{tpu_custom_call.1} parent=1 // pred_region
      %s40 = ssub.s32 6144, 6144
      %41 = vsyncadd [#allocation7], %s40
      %s42 = sshll.u32 [#allocation6], 4
      %s43 = int_to_ptr.vmem [resolvable:$true] %s42
      %48 = dma.hbm_to_vmem [thread:$0]  %s5, 6144, %s43, [#allocation7], 384, 384, 24
    $region25: #{tpu_custom_call.1} parent=1 // pred_fallthru
      _
    // Predicated region
    $region26: #{tpu_custom_call.1} parent=1 // pred_check
      _
    $region27: #{tpu_custom_call.1} parent=1 // pred_check_branch
      %50 = sbr.rel (0) target = $region29
    $region28: #{tpu_custom_call.1} parent=1 // pred_region
      _
    $region29: #{tpu_custom_call.1} parent=1 // pred_fallthru
      _
    // Predicated region
    $region30: #{tpu_custom_call.1} parent=1 // pred_check
      _
    $region31: #{tpu_custom_call.1} parent=1 // pred_check_branch
      %52 = sbr.rel (0) target = $region33
    $region32: #{tpu_custom_call.1} parent=1 // pred_region
      _
    $region33: #{tpu_custom_call.1} parent=1 // pred_fallthru
      _
    // Predicated region
    $region34: #{tpu_custom_call.1} parent=1 // pred_check
      _
    $region35: #{tpu_custom_call.1} parent=1 // pred_check_branch
      %54 = sbr.rel (0) target = $region37
    $region36: #{tpu_custom_call.1} parent=1 // pred_region
      _
    $region37: #{tpu_custom_call.1} parent=1 // pred_fallthru
      _
    // Predicated region
    $region38: #{tpu_custom_call.1} parent=1 // pred_check
      _
    $region39: #{tpu_custom_call.1} parent=1 // pred_check_branch
      %56 = sbr.rel (0) target = $region41
    $region40: #{tpu_custom_call.1} parent=1 // pred_region
      %57 = dma.done [#allocation4], 6144
    $region41: #{tpu_custom_call.1} parent=1 // pred_fallthru
      _
    // Predicated region
    $region42: #{tpu_custom_call.1} parent=1 // pred_check
      _
    $region43: #{tpu_custom_call.1} parent=1 // pred_check_branch
      %59 = sbr.rel (0) target = $region45
    $region44: #{tpu_custom_call.1} parent=1 // pred_region
      %60 = dma.done [#allocation7], 6144
    $region45: #{tpu_custom_call.1} parent=1 // pred_fallthru
      _
    %v61 = vld [vmem:[%s0] sm:$0xff]
    %v62 = vld [vmem:[%s0 + $0x8] sm:$0xff]
    %v63 = vld [vmem:[%s0 + $0x10] sm:$0xff]
    %v64 = vld [vmem:[%s0 + $0x18] sm:$0xff]
    %v65 = vld [vmem:[%s0 + $0x20] sm:$0xff]
    %v66 = vld [vmem:[%s0 + $0x28] sm:$0xff]
    %v67 = vld [vmem:[%s0 + $0x30] sm:$0xff]
    %v68 = vld [vmem:[%s0 + $0x38] sm:$0xff]
    %v69 = vld [vmem:[%s0 + $0x40] sm:$0xff]
    %v70 = vld [vmem:[%s0 + $0x48] sm:$0xff]
    %v71 = vld [vmem:[%s0 + $0x50] sm:$0xff]
    %v72 = vld [vmem:[%s0 + $0x58] sm:$0xff]
    %v73 = vld [vmem:[%s0 + $0x60] sm:$0xff]
    %v74 = vld [vmem:[%s0 + $0x68] sm:$0xff]
    %v75 = vld [vmem:[%s0 + $0x70] sm:$0xff]
    %v76 = vld [vmem:[%s0 + $0x78] sm:$0xff]
    %v77 = vld [vmem:[%s1] sm:$0xff]
    %v78 = vld [vmem:[%s1 + $0x8] sm:$0xf]
    %v79 = vld [vmem:[%s2] sm:$0x1]
    %v81 = vlaneseq
    %v82 = vshrl.u32 %v81, 7
    %v83 = vsub.s32 0, %v82
    %v84 = vrot.slane %v79, %v83
    %vm86 = vcmask 97280
    %v88 = vsel %vm86, %v61, 0
    %v91 = vsel %vm86, %v62, 0
    %v94 = vsel %vm86, %v63, 0
    %v97 = vsel %vm86, %v64, 0
    %v100 = vsel %vm86, %v65, 0
    %v103 = vsel %vm86, %v66, 0
    %v106 = vsel %vm86, %v67, 0
    %v109 = vsel %vm86, %v68, 0
    %v112 = vsel %vm86, %v69, 0
    %v115 = vsel %vm86, %v70, 0
    %v118 = vsel %vm86, %v71, 0
    %v121 = vsel %vm86, %v72, 0
    %v124 = vsel %vm86, %v73, 0
    %v127 = vsel %vm86, %v74, 0
    %v130 = vsel %vm86, %v75, 0
    %v133 = vsel %vm86, %v76, 0
    %vm135 = vcmask 1043456
    %v137 = vsel %vm135, %v78, 0
    %139 = vmatprep.subr.mxu0 0.0
    %140 = vmatpush1.msra.mxu0 %v77
    %141 = vmatprep.subr.mxu0 0.0
    %142 = vmatpush1.msra.mxu0 %v137
    %143 = vmatprep.subr.mxu0 0.0
    %144 = vmatpush1.msra.mxu0 0.0
    %145 = vmatprep.subr.mxu0 0.0
    %146 = vmatpush1.msra.mxu0 0.0
    %147 = vmatprep.subr.mxu0 0.0
    %148 = vmatpush1.msra.mxu0 0.0
    %149 = vmatprep.subr.mxu0 0.0
    %150 = vmatpush1.msra.mxu0 0.0
    %151 = vmatprep.subr.mxu0 0.0
    %152 = vmatpush1.msra.mxu0 0.0
    %153 = vmatprep.subr.mxu0 0.0
    %154 = vmatpush1.msra.mxu0 0.0
    %155 = vmatprep.subr.mxu0 0.0
    %156 = vmatpush1.msra.mxu0 0.0
    %157 = vmatprep.subr.mxu0 0.0
    %158 = vmatpush1.msra.mxu0 0.0
    %159 = vmatprep.subr.mxu0 0.0
    %160 = vmatpush1.msra.mxu0 0.0
    %161 = vmatprep.subr.mxu0 0.0
    %162 = vmatpush1.msra.mxu0 0.0
    %163 = vmatprep.subr.mxu0 0.0
    %164 = vmatpush1.msra.mxu0 0.0
    %165 = vmatprep.subr.mxu0 0.0
    %166 = vmatpush1.msra.mxu0 0.0
    %167 = vmatprep.subr.mxu0 0.0
    %168 = vmatpush1.msra.mxu0 0.0
    %169 = vmatprep.subr.mxu0 0.0
    %170 = vmatpush1.msra.mxu0 0.0
    %171 = vmatprep.subr.mxu0 0.0
    %172 = vmatpush1.msra.mxu0 0.0
    %173 = vmatprep.subr.mxu0 0.0
    %174 = vmatpush1.msra.mxu0 0.0
    %175 = vmatprep.subr.mxu0 0.0
    %176 = vmatpush1.msra.mxu0 0.0
    %177 = vmatprep.subr.mxu0 0.0
    %178 = vmatpush1.msra.mxu0 0.0
    %179 = vmatprep.subr.mxu0 0.0
    %180 = vmatpush1.msra.mxu0 0.0
    %181 = vmatprep.subr.mxu0 0.0
    %182 = vmatpush1.msra.mxu0 0.0
    %183 = vmatprep.subr.mxu0 0.0
    %184 = vmatpush1.msra.mxu0 0.0
    %185 = vmatprep.subr.mxu0 0.0
    %186 = vmatpush1.msra.mxu0 0.0
    %187 = vmatprep.subr.mxu0 0.0
    %188 = vmatpush1.msra.mxu0 0.0
    %189 = vmatprep.subr.mxu0 0.0
    %190 = vmatpush1.msra.mxu0 0.0
    %191 = vmatprep.subr.mxu0 0.0
    %192 = vmatpush1.msra.mxu0 0.0
    %193 = vmatprep.subr.mxu0 0.0
    %194 = vmatpush1.msra.mxu0 0.0
    %195 = vmatprep.subr.mxu0 0.0
    %196 = vmatpush1.msra.mxu0 0.0
    %197 = vmatprep.subr.mxu0 0.0
    %198 = vmatpush1.msra.mxu0 0.0
    %199 = vmatprep.subr.mxu0 0.0
    %200 = vmatpush1.msra.mxu0 0.0
    %201 = vmatprep.subr.mxu0 0.0
    %202 = vmatpush1.msra.mxu0 0.0
    %203 = vmatprep.mubr.f32.mxu0 0.0
    %204 = vmatmul.mubr.f32.gmra.mrb[0].mxu0 %v88
    %v205 = vpop.f32.mrb[0].mxu0
    %v206 = vadd.f32 %v84, %v205
    %v207 = vpop.f32.mrb[0].mxu0
    %208 = vmatprep.mubr.f32.mxu0 0.0
    %209 = vmatmul.mubr.f32.gmra.mrb[0].mxu0 %v91
    %v210 = vpop.f32.mrb[0].mxu0
    %v211 = vadd.f32 %v84, %v210
    %v212 = vpop.f32.mrb[0].mxu0
    %213 = vmatprep.mubr.f32.mxu0 0.0
    %214 = vmatmul.mubr.f32.gmra.mrb[0].mxu0 %v94
    %v215 = vpop.f32.mrb[0].mxu0
    %v216 = vadd.f32 %v84, %v215
    %v217 = vpop.f32.mrb[0].mxu0
    %218 = vmatprep.mubr.f32.mxu0 0.0
    %219 = vmatmul.mubr.f32.gmra.mrb[0].mxu0 %v97
    %v220 = vpop.f32.mrb[0].mxu0
    %v221 = vadd.f32 %v84, %v220
    %v222 = vpop.f32.mrb[0].mxu0
    %223 = vmatprep.mubr.f32.mxu0 0.0
    %224 = vmatmul.mubr.f32.gmra.mrb[0].mxu0 %v100
    %v225 = vpop.f32.mrb[0].mxu0
    %v226 = vadd.f32 %v84, %v225
    %v227 = vpop.f32.mrb[0].mxu0
    %228 = vmatprep.mubr.f32.mxu0 0.0
    %229 = vmatmul.mubr.f32.gmra.mrb[0].mxu0 %v103
    %v230 = vpop.f32.mrb[0].mxu0
    %v231 = vadd.f32 %v84, %v230
    %v232 = vpop.f32.mrb[0].mxu0
    %233 = vmatprep.mubr.f32.mxu0 0.0
    %234 = vmatmul.mubr.f32.gmra.mrb[0].mxu0 %v106
    %v235 = vpop.f32.mrb[0].mxu0
    %v236 = vadd.f32 %v84, %v235
    %v237 = vpop.f32.mrb[0].mxu0
    %238 = vmatprep.mubr.f32.mxu0 0.0
    %239 = vmatmul.mubr.f32.gmra.mrb[0].mxu0 %v109
    %v240 = vpop.f32.mrb[0].mxu0
    %v241 = vadd.f32 %v84, %v240
    %v242 = vpop.f32.mrb[0].mxu0
    %243 = vmatprep.mubr.f32.mxu0 0.0
    %244 = vmatmul.mubr.f32.gmra.mrb[0].mxu0 %v112
    %v245 = vpop.f32.mrb[0].mxu0
    %v246 = vadd.f32 %v84, %v245
    %v247 = vpop.f32.mrb[0].mxu0
    %248 = vmatprep.mubr.f32.mxu0 0.0
    %249 = vmatmul.mubr.f32.gmra.mrb[0].mxu0 %v115
    %v250 = vpop.f32.mrb[0].mxu0
    %v251 = vadd.f32 %v84, %v250
    %v252 = vpop.f32.mrb[0].mxu0
    %253 = vmatprep.mubr.f32.mxu0 0.0
    %254 = vmatmul.mubr.f32.gmra.mrb[0].mxu0 %v118
    %v255 = vpop.f32.mrb[0].mxu0
    %v256 = vadd.f32 %v84, %v255
    %v257 = vpop.f32.mrb[0].mxu0
    %258 = vmatprep.mubr.f32.mxu0 0.0
    %259 = vmatmul.mubr.f32.gmra.mrb[0].mxu0 %v121
    %v260 = vpop.f32.mrb[0].mxu0
    %v261 = vadd.f32 %v84, %v260
    %v262 = vpop.f32.mrb[0].mxu0
    %263 = vmatprep.mubr.f32.mxu0 0.0
    %264 = vmatmul.mubr.f32.gmra.mrb[0].mxu0 %v124
    %v265 = vpop.f32.mrb[0].mxu0
    %v266 = vadd.f32 %v84, %v265
    %v267 = vpop.f32.mrb[0].mxu0
    %268 = vmatprep.mubr.f32.mxu0 0.0
    %269 = vmatmul.mubr.f32.gmra.mrb[0].mxu0 %v127
    %v270 = vpop.f32.mrb[0].mxu0
    %v271 = vadd.f32 %v84, %v270
    %v272 = vpop.f32.mrb[0].mxu0
    %273 = vmatprep.mubr.f32.mxu0 0.0
    %274 = vmatmul.mubr.f32.gmra.mrb[0].mxu0 %v130
    %v275 = vpop.f32.mrb[0].mxu0
    %v276 = vadd.f32 %v84, %v275
    %v277 = vpop.f32.mrb[0].mxu0
    %278 = vmatprep.mubr.f32.mxu0 0.0
    %279 = vmatmul.mubr.f32.gmra.mrb[0].mxu0 %v133
    %v280 = vpop.f32.mrb[0].mxu0
    %v281 = vadd.f32 %v84, %v280
    %v282 = vpop.f32.mrb[0].mxu0
    %283 = vdwg.mxu0
    %v284 = vmax.f32 %v206, 0.0
    %v285 = vmax.f32 %v211, 0.0
    %v286 = vmax.f32 %v216, 0.0
    %v287 = vmax.f32 %v221, 0.0
    %v288 = vmax.f32 %v226, 0.0
    %v289 = vmax.f32 %v231, 0.0
    %v290 = vmax.f32 %v236, 0.0
    %v291 = vmax.f32 %v241, 0.0
    %v292 = vmax.f32 %v246, 0.0
    %v293 = vmax.f32 %v251, 0.0
    %v294 = vmax.f32 %v256, 0.0
    %v295 = vmax.f32 %v261, 0.0
    %v296 = vmax.f32 %v266, 0.0
    %v297 = vmax.f32 %v271, 0.0
    %v298 = vmax.f32 %v276, 0.0
    %v299 = vmax.f32 %v281, 0.0
    %v300 = vmax.f32 %v284, %v285
    %v301 = vmax.f32 %v286, %v287
    %v302 = vmax.f32 %v288, %v289
    %v303 = vmax.f32 %v290, %v291
    %v304 = vmax.f32 %v292, %v293
    %v305 = vmax.f32 %v294, %v295
    %v306 = vmax.f32 %v296, %v297
    %v307 = vmax.f32 %v298, %v299
    %v308 = vld [vmem:[#allocation3] sm:$0xff]
    %v309 = vld [vmem:[#allocation3 + $0x8] sm:$0xff]
    %v310 = vld [vmem:[#allocation3 + $0x10] sm:$0xff]
    %v311 = vld [vmem:[#allocation3 + $0x18] sm:$0xff]
    %v312 = vld [vmem:[#allocation3 + $0x20] sm:$0xff]
    %v313 = vld [vmem:[#allocation3 + $0x28] sm:$0xff]
    %v314 = vld [vmem:[#allocation3 + $0x30] sm:$0xff]
    %v315 = vld [vmem:[#allocation3 + $0x38] sm:$0xff]
    %v316 = vld [vmem:[#allocation3 + $0x40] sm:$0xff]
    %v317 = vld [vmem:[#allocation3 + $0x48] sm:$0xff]
    %v318 = vld [vmem:[#allocation3 + $0x50] sm:$0xff]
    %v319 = vld [vmem:[#allocation3 + $0x58] sm:$0xff]
    %v320 = vld [vmem:[#allocation3 + $0x60] sm:$0xff]
    %v321 = vld [vmem:[#allocation3 + $0x68] sm:$0xff]
    %v322 = vld [vmem:[#allocation3 + $0x70] sm:$0xff]
    %v323 = vld [vmem:[#allocation3 + $0x78] sm:$0xff]
    %v324 = vld [vmem:[#allocation3 + $0x80] sm:$0xff]
    %v325 = vld [vmem:[#allocation3 + $0x88] sm:$0xff]
    %v326 = vld [vmem:[#allocation3 + $0x90] sm:$0xff]
    %v327 = vld [vmem:[#allocation3 + $0x98] sm:$0xff]
    %v328 = vld [vmem:[#allocation3 + $0xa0] sm:$0xff]
    %v329 = vld [vmem:[#allocation3 + $0xa8] sm:$0xff]
    %v330 = vld [vmem:[#allocation3 + $0xb0] sm:$0xff]
    %v331 = vld [vmem:[#allocation3 + $0xb8] sm:$0xff]
    %v332 = vld [vmem:[#allocation3 + $0xc0] sm:$0xff]
    %v333 = vld [vmem:[#allocation3 + $0xc8] sm:$0xff]
    %v334 = vld [vmem:[#allocation3 + $0xd0] sm:$0xff]
    %v335 = vld [vmem:[#allocation3 + $0xd8] sm:$0xff]
    %v336 = vld [vmem:[#allocation3 + $0xe0] sm:$0xff]
    %v337 = vld [vmem:[#allocation3 + $0xe8] sm:$0xff]
    %v338 = vld [vmem:[#allocation3 + $0xf0] sm:$0xff]
    %v339 = vld [vmem:[#allocation3 + $0xf8] sm:$0xff]
    %v340 = vld [vmem:[#allocation3 + $0x100] sm:$0xff]
    %v341 = vld [vmem:[#allocation3 + $0x108] sm:$0xff]
    %v342 = vld [vmem:[#allocation3 + $0x110] sm:$0xff]
    %v343 = vld [vmem:[#allocation3 + $0x118] sm:$0xff]
    %v344 = vld [vmem:[#allocation3 + $0x120] sm:$0xff]
    %v345 = vld [vmem:[#allocation3 + $0x128] sm:$0xff]
    %v346 = vld [vmem:[#allocation3 + $0x130] sm:$0xff]
    %v347 = vld [vmem:[#allocation3 + $0x138] sm:$0xff]
    %v348 = vld [vmem:[#allocation3 + $0x140] sm:$0xff]
    %v349 = vld [vmem:[#allocation3 + $0x148] sm:$0xff]
    %v350 = vld [vmem:[#allocation3 + $0x150] sm:$0xff]
    %v351 = vld [vmem:[#allocation3 + $0x158] sm:$0xff]
    %v352 = vld [vmem:[#allocation3 + $0x160] sm:$0xff]
    %v353 = vld [vmem:[#allocation3 + $0x168] sm:$0xff]
    %v354 = vld [vmem:[#allocation3 + $0x170] sm:$0xff]
    %v355 = vld [vmem:[#allocation3 + $0x178] sm:$0xff]
    %v356 = vld [vmem:[%s4] sm:$0x7]
    %v358 = vlaneseq
    %v359 = vshrl.u32 %v358, 7
    %v360 = vsub.s32 0, %v359
    %v361 = vrot.slane %v356, %v360
    %v362 = vlaneseq
    %v363 = vshrl.u32 %v362, 7
    %v364 = vsub.s32 1, %v363
    %v365 = vrot.slane %v356, %v364
    %v366 = vlaneseq
    %v367 = vshrl.u32 %v366, 7
    %v368 = vsub.s32 2, %v367
    %v369 = vrot.slane %v356, %v368
    %373 = vmatprep.subr.mxu0 %v309
    %374 = vmatpush1.msra.mxu0 %v308
    %375 = vmatprep.subr.mxu0 %v312
    %376 = vmatpush1.msra.mxu0 %v311
    %377 = vmatprep.subr.mxu0 %v315
    %378 = vmatpush1.msra.mxu0 %v314
    %379 = vmatprep.subr.mxu0 %v318
    %380 = vmatpush1.msra.mxu0 %v317
    %381 = vmatprep.subr.mxu0 %v321
    %382 = vmatpush1.msra.mxu0 %v320
    %383 = vmatprep.subr.mxu0 %v324
    %384 = vmatpush1.msra.mxu0 %v323
    %385 = vmatprep.subr.mxu0 %v327
    %386 = vmatpush1.msra.mxu0 %v326
    %387 = vmatprep.subr.mxu0 %v330
    %388 = vmatpush1.msra.mxu0 %v329
    %389 = vmatprep.subr.mxu0 %v333
    %390 = vmatpush1.msra.mxu0 %v332
    %391 = vmatprep.subr.mxu0 %v336
    %392 = vmatpush1.msra.mxu0 %v335
    %393 = vmatprep.subr.mxu0 %v339
    %394 = vmatpush1.msra.mxu0 %v338
    %395 = vmatprep.subr.mxu0 %v342
    %396 = vmatpush1.msra.mxu0 %v341
    %397 = vmatprep.subr.mxu0 %v345
    %398 = vmatpush1.msra.mxu0 %v344
    %399 = vmatprep.subr.mxu0 %v348
    %400 = vmatpush1.msra.mxu0 %v347
    %401 = vmatprep.subr.mxu0 %v351
    %402 = vmatpush1.msra.mxu0 %v350
    %403 = vmatprep.subr.mxu0 %v354
    %404 = vmatpush1.msra.mxu0 %v353
    %405 = vmatprep.subr.mxu0 0.0
    %406 = vmatpush1.msra.mxu0 0.0
    %407 = vmatprep.subr.mxu0 0.0
    %408 = vmatpush1.msra.mxu0 0.0
    %409 = vmatprep.subr.mxu0 0.0
    %410 = vmatpush1.msra.mxu0 0.0
    %411 = vmatprep.subr.mxu0 0.0
    %412 = vmatpush1.msra.mxu0 0.0
    %413 = vmatprep.subr.mxu0 0.0
    %414 = vmatpush1.msra.mxu0 0.0
    %415 = vmatprep.subr.mxu0 0.0
    %416 = vmatpush1.msra.mxu0 0.0
    %417 = vmatprep.subr.mxu0 0.0
    %418 = vmatpush1.msra.mxu0 0.0
    %419 = vmatprep.subr.mxu0 0.0
    %420 = vmatpush1.msra.mxu0 0.0
    %421 = vmatprep.subr.mxu0 0.0
    %422 = vmatpush1.msra.mxu0 0.0
    %423 = vmatprep.subr.mxu0 0.0
    %424 = vmatpush1.msra.mxu0 0.0
    %425 = vmatprep.subr.mxu0 0.0
    %426 = vmatpush1.msra.mxu0 0.0
    %427 = vmatprep.subr.mxu0 0.0
    %428 = vmatpush1.msra.mxu0 0.0
    %429 = vmatprep.subr.mxu0 0.0
    %430 = vmatpush1.msra.mxu0 0.0
    %431 = vmatprep.subr.mxu0 0.0
    %432 = vmatpush1.msra.mxu0 0.0
    %433 = vmatprep.subr.mxu0 0.0
    %434 = vmatpush1.msra.mxu0 0.0
    %435 = vmatprep.subr.mxu0 0.0
    %436 = vmatpush1.msra.mxu0 0.0
    %437 = vmatprep.mubr.f32.mxu0 0.0
    %438 = vmatmul.mubr.f32.gmra.mrb[0].mxu0 %v300
    %v439 = vpop.f32.mrb[0].mxu0
    %v440 = vadd.f32 %v361, %v439
    %v441 = vpop.f32.mrb[0].mxu0
    %v442 = vadd.f32 %v365, %v441
    %443 = vmatprep.mubr.f32.mxu0 0.0
    %444 = vmatmul.mubr.f32.gmra.mrb[0].mxu0 %v301
    %v445 = vpop.f32.mrb[0].mxu0
    %v446 = vadd.f32 %v361, %v445
    %v447 = vpop.f32.mrb[0].mxu0
    %v448 = vadd.f32 %v365, %v447
    %449 = vmatprep.mubr.f32.mxu0 0.0
    %450 = vmatmul.mubr.f32.gmra.mrb[0].mxu0 %v302
    %v451 = vpop.f32.mrb[0].mxu0
    %v452 = vadd.f32 %v361, %v451
    %v453 = vpop.f32.mrb[0].mxu0
    %v454 = vadd.f32 %v365, %v453
    %455 = vmatprep.mubr.f32.mxu0 0.0
    %456 = vmatmul.mubr.f32.gmra.mrb[0].mxu0 %v303
    %v457 = vpop.f32.mrb[0].mxu0
    %v458 = vadd.f32 %v361, %v457
    %v459 = vpop.f32.mrb[0].mxu0
    %v460 = vadd.f32 %v365, %v459
    %461 = vmatprep.mubr.f32.mxu0 0.0
    %462 = vmatmul.mubr.f32.gmra.mrb[0].mxu0 %v304
    %v463 = vpop.f32.mrb[0].mxu0
    %v464 = vadd.f32 %v361, %v463
    %v465 = vpop.f32.mrb[0].mxu0
    %v466 = vadd.f32 %v365, %v465
    %467 = vmatprep.mubr.f32.mxu0 0.0
    %468 = vmatmul.mubr.f32.gmra.mrb[0].mxu0 %v305
    %v469 = vpop.f32.mrb[0].mxu0
    %v470 = vadd.f32 %v361, %v469
    %v471 = vpop.f32.mrb[0].mxu0
    %v472 = vadd.f32 %v365, %v471
    %473 = vmatprep.mubr.f32.mxu0 0.0
    %474 = vmatmul.mubr.f32.gmra.mrb[0].mxu0 %v306
    %v475 = vpop.f32.mrb[0].mxu0
    %v476 = vadd.f32 %v361, %v475
    %v477 = vpop.f32.mrb[0].mxu0
    %v478 = vadd.f32 %v365, %v477
    %479 = vmatprep.mubr.f32.mxu0 0.0
    %480 = vmatmul.mubr.f32.gmra.mrb[0].mxu0 %v307
    %v481 = vpop.f32.mrb[0].mxu0
    %v482 = vadd.f32 %v361, %v481
    %v483 = vpop.f32.mrb[0].mxu0
    %v484 = vadd.f32 %v365, %v483
    %485 = vdwg.mxu0
    %486 = vmatprep.subr.mxu0 0.0
    %487 = vmatpush1.msra.mxu0 %v310
    %488 = vmatprep.subr.mxu0 0.0
    %489 = vmatpush1.msra.mxu0 %v313
    %490 = vmatprep.subr.mxu0 0.0
    %491 = vmatpush1.msra.mxu0 %v316
    %492 = vmatprep.subr.mxu0 0.0
    %493 = vmatpush1.msra.mxu0 %v319
    %494 = vmatprep.subr.mxu0 0.0
    %495 = vmatpush1.msra.mxu0 %v322
    %496 = vmatprep.subr.mxu0 0.0
    %497 = vmatpush1.msra.mxu0 %v325
    %498 = vmatprep.subr.mxu0 0.0
    %499 = vmatpush1.msra.mxu0 %v328
    %500 = vmatprep.subr.mxu0 0.0
    %501 = vmatpush1.msra.mxu0 %v331
    %502 = vmatprep.subr.mxu0 0.0
    %503 = vmatpush1.msra.mxu0 %v334
    %504 = vmatprep.subr.mxu0 0.0
    %505 = vmatpush1.msra.mxu0 %v337
    %506 = vmatprep.subr.mxu0 0.0
    %507 = vmatpush1.msra.mxu0 %v340
    %508 = vmatprep.subr.mxu0 0.0
    %509 = vmatpush1.msra.mxu0 %v343
    %510 = vmatprep.subr.mxu0 0.0
    %511 = vmatpush1.msra.mxu0 %v346
    %512 = vmatprep.subr.mxu0 0.0
    %513 = vmatpush1.msra.mxu0 %v349
    %514 = vmatprep.subr.mxu0 0.0
    %515 = vmatpush1.msra.mxu0 %v352
    %516 = vmatprep.subr.mxu0 0.0
    %517 = vmatpush1.msra.mxu0 %v355
    %518 = vmatprep.subr.mxu0 0.0
    %519 = vmatpush1.msra.mxu0 0.0
    %520 = vmatprep.subr.mxu0 0.0
    %521 = vmatpush1.msra.mxu0 0.0
    %522 = vmatprep.subr.mxu0 0.0
    %523 = vmatpush1.msra.mxu0 0.0
    %524 = vmatprep.subr.mxu0 0.0
    %525 = vmatpush1.msra.mxu0 0.0
    %526 = vmatprep.subr.mxu0 0.0
    %527 = vmatpush1.msra.mxu0 0.0
    %528 = vmatprep.subr.mxu0 0.0
    %529 = vmatpush1.msra.mxu0 0.0
    %530 = vmatprep.subr.mxu0 0.0
    %531 = vmatpush1.msra.mxu0 0.0
    %532 = vmatprep.subr.mxu0 0.0
    %533 = vmatpush1.msra.mxu0 0.0
    %534 = vmatprep.subr.mxu0 0.0
    %535 = vmatpush1.msra.mxu0 0.0
    %536 = vmatprep.subr.mxu0 0.0
    %537 = vmatpush1.msra.mxu0 0.0
    %538 = vmatprep.subr.mxu0 0.0
    %539 = vmatpush1.msra.mxu0 0.0
    %540 = vmatprep.subr.mxu0 0.0
    %541 = vmatpush1.msra.mxu0 0.0
    %542 = vmatprep.subr.mxu0 0.0
    %543 = vmatpush1.msra.mxu0 0.0
    %544 = vmatprep.subr.mxu0 0.0
    %545 = vmatpush1.msra.mxu0 0.0
    %546 = vmatprep.subr.mxu0 0.0
    %547 = vmatpush1.msra.mxu0 0.0
    %548 = vmatprep.subr.mxu0 0.0
    %549 = vmatpush1.msra.mxu0 0.0
    %550 = vmatprep.mubr.f32.mxu0 0.0
    %551 = vmatmul.mubr.f32.gmra.mrb[0].mxu0 %v300
    %v552 = vpop.f32.mrb[0].mxu0
    %v553 = vadd.f32 %v369, %v552
    %v554 = vpop.f32.mrb[0].mxu0
    %555 = vmatprep.mubr.f32.mxu0 0.0
    %556 = vmatmul.mubr.f32.gmra.mrb[0].mxu0 %v301
    %v557 = vpop.f32.mrb[0].mxu0
    %v558 = vadd.f32 %v369, %v557
    %v559 = vpop.f32.mrb[0].mxu0
    %560 = vmatprep.mubr.f32.mxu0 0.0
    %561 = vmatmul.mubr.f32.gmra.mrb[0].mxu0 %v302
    %v562 = vpop.f32.mrb[0].mxu0
    %v563 = vadd.f32 %v369, %v562
    %v564 = vpop.f32.mrb[0].mxu0
    %565 = vmatprep.mubr.f32.mxu0 0.0
    %566 = vmatmul.mubr.f32.gmra.mrb[0].mxu0 %v303
    %v567 = vpop.f32.mrb[0].mxu0
    %v568 = vadd.f32 %v369, %v567
    %v569 = vpop.f32.mrb[0].mxu0
    %570 = vmatprep.mubr.f32.mxu0 0.0
    %571 = vmatmul.mubr.f32.gmra.mrb[0].mxu0 %v304
    %v572 = vpop.f32.mrb[0].mxu0
    %v573 = vadd.f32 %v369, %v572
    %v574 = vpop.f32.mrb[0].mxu0
    %575 = vmatprep.mubr.f32.mxu0 0.0
    %576 = vmatmul.mubr.f32.gmra.mrb[0].mxu0 %v305
    %v577 = vpop.f32.mrb[0].mxu0
    %v578 = vadd.f32 %v369, %v577
    %v579 = vpop.f32.mrb[0].mxu0
    %580 = vmatprep.mubr.f32.mxu0 0.0
    %581 = vmatmul.mubr.f32.gmra.mrb[0].mxu0 %v306
    %v582 = vpop.f32.mrb[0].mxu0
    %v583 = vadd.f32 %v369, %v582
    %v584 = vpop.f32.mrb[0].mxu0
    %585 = vmatprep.mubr.f32.mxu0 0.0
    %586 = vmatmul.mubr.f32.gmra.mrb[0].mxu0 %v307
    %v587 = vpop.f32.mrb[0].mxu0
    %v588 = vadd.f32 %v369, %v587
    %v589 = vpop.f32.mrb[0].mxu0
    %590 = vdwg.mxu0
    %591 = vst [vmem:[#allocation2] sm:$0xff] %v440
    %592 = vst [vmem:[#allocation2 + $0x8] sm:$0xff] %v442
    %593 = vst [vmem:[#allocation2 + $0x10] sm:$0xff] %v553
    %594 = vst [vmem:[#allocation2 + $0x18] sm:$0xff] %v446
    %595 = vst [vmem:[#allocation2 + $0x20] sm:$0xff] %v448
    %596 = vst [vmem:[#allocation2 + $0x28] sm:$0xff] %v558
    %597 = vst [vmem:[#allocation2 + $0x30] sm:$0xff] %v452
    %598 = vst [vmem:[#allocation2 + $0x38] sm:$0xff] %v454
    %599 = vst [vmem:[#allocation2 + $0x40] sm:$0xff] %v563
    %600 = vst [vmem:[#allocation2 + $0x48] sm:$0xff] %v458
    %601 = vst [vmem:[#allocation2 + $0x50] sm:$0xff] %v460
    %602 = vst [vmem:[#allocation2 + $0x58] sm:$0xff] %v568
    %603 = vst [vmem:[#allocation2 + $0x60] sm:$0xff] %v464
    %604 = vst [vmem:[#allocation2 + $0x68] sm:$0xff] %v466
    %605 = vst [vmem:[#allocation2 + $0x70] sm:$0xff] %v573
    %606 = vst [vmem:[#allocation2 + $0x78] sm:$0xff] %v470
    %607 = vst [vmem:[#allocation2 + $0x80] sm:$0xff] %v472
    %608 = vst [vmem:[#allocation2 + $0x88] sm:$0xff] %v578
    %609 = vst [vmem:[#allocation2 + $0x90] sm:$0xff] %v476
    %610 = vst [vmem:[#allocation2 + $0x98] sm:$0xff] %v478
    %611 = vst [vmem:[#allocation2 + $0xa0] sm:$0xff] %v583
    %612 = vst [vmem:[#allocation2 + $0xa8] sm:$0xff] %v482
    %613 = vst [vmem:[#allocation2 + $0xb0] sm:$0xff] %v484
    %614 = vst [vmem:[#allocation2 + $0xb8] sm:$0xff] %v588
    %v615 = vld [vmem:[#allocation6] sm:$0xff]
    %v616 = vld [vmem:[#allocation6 + $0x8] sm:$0xff]
    %v617 = vld [vmem:[#allocation6 + $0x10] sm:$0xff]
    %v618 = vld [vmem:[#allocation6 + $0x18] sm:$0xff]
    %v619 = vld [vmem:[#allocation6 + $0x20] sm:$0xff]
    %v620 = vld [vmem:[#allocation6 + $0x28] sm:$0xff]
    %v621 = vld [vmem:[#allocation6 + $0x30] sm:$0xff]
    %v622 = vld [vmem:[#allocation6 + $0x38] sm:$0xff]
    %v623 = vld [vmem:[#allocation6 + $0x40] sm:$0xff]
    %v624 = vld [vmem:[#allocation6 + $0x48] sm:$0xff]
    %v625 = vld [vmem:[#allocation6 + $0x50] sm:$0xff]
    %v626 = vld [vmem:[#allocation6 + $0x58] sm:$0xff]
    %v627 = vld [vmem:[#allocation6 + $0x60] sm:$0xff]
    %v628 = vld [vmem:[#allocation6 + $0x68] sm:$0xff]
    %v629 = vld [vmem:[#allocation6 + $0x70] sm:$0xff]
    %v630 = vld [vmem:[#allocation6 + $0x78] sm:$0xff]
    %v631 = vld [vmem:[#allocation6 + $0x80] sm:$0xff]
    %v632 = vld [vmem:[#allocation6 + $0x88] sm:$0xff]
    %v633 = vld [vmem:[#allocation6 + $0x90] sm:$0xff]
    %v634 = vld [vmem:[#allocation6 + $0x98] sm:$0xff]
    %v635 = vld [vmem:[#allocation6 + $0xa0] sm:$0xff]
    %v636 = vld [vmem:[#allocation6 + $0xa8] sm:$0xff]
    %v637 = vld [vmem:[#allocation6 + $0xb0] sm:$0xff]
    %v638 = vld [vmem:[#allocation6 + $0xb8] sm:$0xff]
    %v639 = vld [vmem:[#allocation6 + $0xc0] sm:$0xff]
    %v640 = vld [vmem:[#allocation6 + $0xc8] sm:$0xff]
    %v641 = vld [vmem:[#allocation6 + $0xd0] sm:$0xff]
    %v642 = vld [vmem:[#allocation6 + $0xd8] sm:$0xff]
    %v643 = vld [vmem:[#allocation6 + $0xe0] sm:$0xff]
    %v644 = vld [vmem:[#allocation6 + $0xe8] sm:$0xff]
    %v645 = vld [vmem:[#allocation6 + $0xf0] sm:$0xff]
    %v646 = vld [vmem:[#allocation6 + $0xf8] sm:$0xff]
    %v647 = vld [vmem:[#allocation6 + $0x100] sm:$0xff]
    %v648 = vld [vmem:[#allocation6 + $0x108] sm:$0xff]
    %v649 = vld [vmem:[#allocation6 + $0x110] sm:$0xff]
    %v650 = vld [vmem:[#allocation6 + $0x118] sm:$0xff]
    %v651 = vld [vmem:[#allocation6 + $0x120] sm:$0xff]
    %v652 = vld [vmem:[#allocation6 + $0x128] sm:$0xff]
    %v653 = vld [vmem:[#allocation6 + $0x130] sm:$0xff]
    %v654 = vld [vmem:[#allocation6 + $0x138] sm:$0xff]
    %v655 = vld [vmem:[#allocation6 + $0x140] sm:$0xff]
    %v656 = vld [vmem:[#allocation6 + $0x148] sm:$0xff]
    %v657 = vld [vmem:[#allocation6 + $0x150] sm:$0xff]
    %v658 = vld [vmem:[#allocation6 + $0x158] sm:$0xff]
    %v659 = vld [vmem:[#allocation6 + $0x160] sm:$0xff]
    %v660 = vld [vmem:[#allocation6 + $0x168] sm:$0xff]
    %v661 = vld [vmem:[#allocation6 + $0x170] sm:$0xff]
    %v662 = vld [vmem:[#allocation6 + $0x178] sm:$0xff]
    %v663 = vld [vmem:[%s6] sm:$0x1]
    %v664 = vld [vmem:[#allocation2] sm:$0xff]
    %v665 = vld [vmem:[#allocation2 + $0x8] sm:$0xff]
    %v666 = vld [vmem:[#allocation2 + $0x10] sm:$0xff]
    %667 = vmatprep.subr.mxu0 %v616
    %668 = vmatpush1.msra.mxu0 %v615
    %669 = vmatprep.subr.mxu0 %v619
    %670 = vmatpush1.msra.mxu0 %v618
    %671 = vmatprep.subr.mxu0 %v622
    %672 = vmatpush1.msra.mxu0 %v621
    %673 = vmatprep.subr.mxu0 %v625
    %674 = vmatpush1.msra.mxu0 %v624
    %675 = vmatprep.subr.mxu0 %v628
    %676 = vmatpush1.msra.mxu0 %v627
    %677 = vmatprep.subr.mxu0 %v631
    %678 = vmatpush1.msra.mxu0 %v630
    %679 = vmatprep.subr.mxu0 %v634
    %680 = vmatpush1.msra.mxu0 %v633
    %681 = vmatprep.subr.mxu0 %v637
    %682 = vmatpush1.msra.mxu0 %v636
    %683 = vmatprep.subr.mxu0 %v640
    %684 = vmatpush1.msra.mxu0 %v639
    %685 = vmatprep.subr.mxu0 %v643
    %686 = vmatpush1.msra.mxu0 %v642
    %687 = vmatprep.subr.mxu0 %v646
    %688 = vmatpush1.msra.mxu0 %v645
    %689 = vmatprep.subr.mxu0 %v649
    %690 = vmatpush1.msra.mxu0 %v648
    %691 = vmatprep.subr.mxu0 %v652
    %692 = vmatpush1.msra.mxu0 %v651
    %693 = vmatprep.subr.mxu0 %v655
    %694 = vmatpush1.msra.mxu0 %v654
    %695 = vmatprep.subr.mxu0 %v658
    %696 = vmatpush1.msra.mxu0 %v657
    %697 = vmatprep.subr.mxu0 %v661
    %698 = vmatpush1.msra.mxu0 %v660
    %699 = vmatprep.subr.mxu0 0.0
    %700 = vmatpush1.msra.mxu0 0.0
    %701 = vmatprep.subr.mxu0 0.0
    %702 = vmatpush1.msra.mxu0 0.0
    %703 = vmatprep.subr.mxu0 0.0
    %704 = vmatpush1.msra.mxu0 0.0
    %705 = vmatprep.subr.mxu0 0.0
    %706 = vmatpush1.msra.mxu0 0.0
    %707 = vmatprep.subr.mxu0 0.0
    %708 = vmatpush1.msra.mxu0 0.0
    %709 = vmatprep.subr.mxu0 0.0
    %710 = vmatpush1.msra.mxu0 0.0
    %711 = vmatprep.subr.mxu0 0.0
    %712 = vmatpush1.msra.mxu0 0.0
    %713 = vmatprep.subr.mxu0 0.0
    %714 = vmatpush1.msra.mxu0 0.0
    %715 = vmatprep.subr.mxu0 0.0
    %716 = vmatpush1.msra.mxu0 0.0
    %717 = vmatprep.subr.mxu0 0.0
    %718 = vmatpush1.msra.mxu0 0.0
    %719 = vmatprep.subr.mxu0 0.0
    %720 = vmatpush1.msra.mxu0 0.0
    %721 = vmatprep.subr.mxu0 0.0
    %722 = vmatpush1.msra.mxu0 0.0
    %723 = vmatprep.subr.mxu0 0.0
    %724 = vmatpush1.msra.mxu0 0.0
    %725 = vmatprep.subr.mxu0 0.0
    %726 = vmatpush1.msra.mxu0 0.0
    %727 = vmatprep.subr.mxu0 0.0
    %728 = vmatpush1.msra.mxu0 0.0
    %729 = vmatprep.subr.mxu0 0.0
    %730 = vmatpush1.msra.mxu0 0.0
    %731 = vmatprep.mubr.f32.mxu0 0.0
    %732 = vmatmul.mubr.f32.gmra.mrb[0].mxu0 0.0
    %v733 = vpop.f32.mrb[0].mxu0
    %v734 = vadd.f32 0.0, %v733
    %v735 = vpop.f32.mrb[0].mxu0
    %v736 = vadd.f32 0.0, %v735
    %737 = vdwg.mxu0
    %738 = vmatprep.subr.mxu0 0.0
    %739 = vmatpush1.msra.mxu0 %v617
    %740 = vmatprep.subr.mxu0 0.0
    %741 = vmatpush1.msra.mxu0 %v620
    %742 = vmatprep.subr.mxu0 0.0
    %743 = vmatpush1.msra.mxu0 %v623
    %744 = vmatprep.subr.mxu0 0.0
    %745 = vmatpush1.msra.mxu0 %v626
    %746 = vmatprep.subr.mxu0 0.0
    %747 = vmatpush1.msra.mxu0 %v629
    %748 = vmatprep.subr.mxu0 0.0
    %749 = vmatpush1.msra.mxu0 %v632
    %750 = vmatprep.subr.mxu0 0.0
    %751 = vmatpush1.msra.mxu0 %v635
    %752 = vmatprep.subr.mxu0 0.0
    %753 = vmatpush1.msra.mxu0 %v638
    %754 = vmatprep.subr.mxu0 0.0
    %755 = vmatpush1.msra.mxu0 %v641
    %756 = vmatprep.subr.mxu0 0.0
    %757 = vmatpush1.msra.mxu0 %v644
    %758 = vmatprep.subr.mxu0 0.0
    %759 = vmatpush1.msra.mxu0 %v647
    %760 = vmatprep.subr.mxu0 0.0
    %761 = vmatpush1.msra.mxu0 %v650
    %762 = vmatprep.subr.mxu0 0.0
    %763 = vmatpush1.msra.mxu0 %v653
    %764 = vmatprep.subr.mxu0 0.0
    %765 = vmatpush1.msra.mxu0 %v656
    %766 = vmatprep.subr.mxu0 0.0
    %767 = vmatpush1.msra.mxu0 %v659
    %768 = vmatprep.subr.mxu0 0.0
    %769 = vmatpush1.msra.mxu0 %v662
    %770 = vmatprep.subr.mxu0 0.0
    %771 = vmatpush1.msra.mxu0 0.0
    %772 = vmatprep.subr.mxu0 0.0
    %773 = vmatpush1.msra.mxu0 0.0
    %774 = vmatprep.subr.mxu0 0.0
    %775 = vmatpush1.msra.mxu0 0.0
    %776 = vmatprep.subr.mxu0 0.0
    %777 = vmatpush1.msra.mxu0 0.0
    %778 = vmatprep.subr.mxu0 0.0
    %779 = vmatpush1.msra.mxu0 0.0
    %780 = vmatprep.subr.mxu0 0.0
    %781 = vmatpush1.msra.mxu0 0.0
    %782 = vmatprep.subr.mxu0 0.0
    %783 = vmatpush1.msra.mxu0 0.0
    %784 = vmatprep.subr.mxu0 0.0
    %785 = vmatpush1.msra.mxu0 0.0
    %786 = vmatprep.subr.mxu0 0.0
    %787 = vmatpush1.msra.mxu0 0.0
    %788 = vmatprep.subr.mxu0 0.0
    %789 = vmatpush1.msra.mxu0 0.0
    %790 = vmatprep.subr.mxu0 0.0
    %791 = vmatpush1.msra.mxu0 0.0
    %792 = vmatprep.subr.mxu0 0.0
    %793 = vmatpush1.msra.mxu0 0.0
    %794 = vmatprep.subr.mxu0 0.0
    %795 = vmatpush1.msra.mxu0 0.0
    %796 = vmatprep.subr.mxu0 0.0
    %797 = vmatpush1.msra.mxu0 0.0
    %798 = vmatprep.subr.mxu0 0.0
    %799 = vmatpush1.msra.mxu0 0.0
    %800 = vmatprep.subr.mxu0 0.0
    %801 = vmatpush1.msra.mxu0 0.0
    %802 = vmatprep.mubr.f32.mxu0 0.0
    %803 = vmatmul.mubr.f32.gmra.mrb[0].mxu0 0.0
    %v804 = vpop.f32.mrb[0].mxu0
    %v805 = vadd.f32 0.0, %v804
    %v806 = vpop.f32.mrb[0].mxu0
    %807 = vdwg.mxu0
    %v808 = vadd.f32 %v664, %v734
    %v809 = vadd.f32 %v665, %v736
    %v810 = vxor.u32 %v808, 2147483648
    %v811 = vxor.u32 %v809, 2147483648
    %v812 = vmul.f32 %v810, 1.442695
    %v813 = vpow.pop %v812
    %v814 = vmul.f32 %v811, 1.442695
    %v815 = vpow.pop %v814
    %v816 = vadd.f32 %v813, 1.0
    %v817 = vadd.f32 %v815, 1.0
    %v818 = vrcp.pop %v816
    %v819 = vmul.f32 1.0, %v818
    %v820 = vrcp.pop %v817
    %v821 = vmul.f32 1.0, %v820
    %v823 = vlaneseq
    %v824 = vshrl.u32 %v823, 7
    %v825 = vsub.s32 0, %v824
    %v826 = vrot.slane %v663, %v825
    %v828 = vadd.f32 %v805, %v826
    %v829 = vmul.f32 %v819, %v828
    %v830 = vadd.f32 %v666, %v829
    %v831 = vtanh.pop %v830
    %v832 = vsub.f32 0.0, %v831
    %v833 = vmul.f32 %v821, %v832
    %v834 = vadd.f32 %v831, %v833
    %s835 = scalar_lea.vmem [#allocation2], 24
    %v836 = vld [vmem:[%s835] sm:$0xff]
    %v837 = vld [vmem:[%s835 + $0x8] sm:$0xff]
    %v838 = vld [vmem:[%s835 + $0x10] sm:$0xff]
    %839 = vmatprep.subr.mxu0 %v616
    %840 = vmatpush1.msra.mxu0 %v615
    %841 = vmatprep.subr.mxu0 %v619
    %842 = vmatpush1.msra.mxu0 %v618
    %843 = vmatprep.subr.mxu0 %v622
    %844 = vmatpush1.msra.mxu0 %v621
    %845 = vmatprep.subr.mxu0 %v625
    %846 = vmatpush1.msra.mxu0 %v624
    %847 = vmatprep.subr.mxu0 %v628
    %848 = vmatpush1.msra.mxu0 %v627
    %849 = vmatprep.subr.mxu0 %v631
    %850 = vmatpush1.msra.mxu0 %v630
    %851 = vmatprep.subr.mxu0 %v634
    %852 = vmatpush1.msra.mxu0 %v633
    %853 = vmatprep.subr.mxu0 %v637
    %854 = vmatpush1.msra.mxu0 %v636
    %855 = vmatprep.subr.mxu0 %v640
    %856 = vmatpush1.msra.mxu0 %v639
    %857 = vmatprep.subr.mxu0 %v643
    %858 = vmatpush1.msra.mxu0 %v642
    %859 = vmatprep.subr.mxu0 %v646
    %860 = vmatpush1.msra.mxu0 %v645
    %861 = vmatprep.subr.mxu0 %v649
    %862 = vmatpush1.msra.mxu0 %v648
    %863 = vmatprep.subr.mxu0 %v652
    %864 = vmatpush1.msra.mxu0 %v651
    %865 = vmatprep.subr.mxu0 %v655
    %866 = vmatpush1.msra.mxu0 %v654
    %867 = vmatprep.subr.mxu0 %v658
    %868 = vmatpush1.msra.mxu0 %v657
    %869 = vmatprep.subr.mxu0 %v661
    %870 = vmatpush1.msra.mxu0 %v660
    %871 = vmatprep.subr.mxu0 0.0
    %872 = vmatpush1.msra.mxu0 0.0
    %873 = vmatprep.subr.mxu0 0.0
    %874 = vmatpush1.msra.mxu0 0.0
    %875 = vmatprep.subr.mxu0 0.0
    %876 = vmatpush1.msra.mxu0 0.0
    %877 = vmatprep.subr.mxu0 0.0
    %878 = vmatpush1.msra.mxu0 0.0
    %879 = vmatprep.subr.mxu0 0.0
    %880 = vmatpush1.msra.mxu0 0.0
    %881 = vmatprep.subr.mxu0 0.0
    %882 = vmatpush1.msra.mxu0 0.0
    %883 = vmatprep.subr.mxu0 0.0
    %884 = vmatpush1.msra.mxu0 0.0
    %885 = vmatprep.subr.mxu0 0.0
    %886 = vmatpush1.msra.mxu0 0.0
    %887 = vmatprep.subr.mxu0 0.0
    %888 = vmatpush1.msra.mxu0 0.0
    %889 = vmatprep.subr.mxu0 0.0
    %890 = vmatpush1.msra.mxu0 0.0
    %891 = vmatprep.subr.mxu0 0.0
    %892 = vmatpush1.msra.mxu0 0.0
    %893 = vmatprep.subr.mxu0 0.0
    %894 = vmatpush1.msra.mxu0 0.0
    %895 = vmatprep.subr.mxu0 0.0
    %896 = vmatpush1.msra.mxu0 0.0
    %897 = vmatprep.subr.mxu0 0.0
    %898 = vmatpush1.msra.mxu0 0.0
    %899 = vmatprep.subr.mxu0 0.0
    %900 = vmatpush1.msra.mxu0 0.0
    %901 = vmatprep.subr.mxu0 0.0
    %902 = vmatpush1.msra.mxu0 0.0
    %903 = vmatprep.mubr.f32.mxu0 0.0
    %904 = vmatmul.mubr.f32.gmra.mrb[0].mxu0 %v834
    %v905 = vpop.f32.mrb[0].mxu0
    %v906 = vadd.f32 0.0, %v905
    %v907 = vpop.f32.mrb[0].mxu0
    %v908 = vadd.f32 0.0, %v907
    %909 = vdwg.mxu0
    %910 = vmatprep.subr.mxu0 0.0
    %911 = vmatpush1.msra.mxu0 %v617
    %912 = vmatprep.subr.mxu0 0.0
    %913 = vmatpush1.msra.mxu0 %v620
    %914 = vmatprep.subr.mxu0 0.0
    %915 = vmatpush1.msra.mxu0 %v623
    %916 = vmatprep.subr.mxu0 0.0
    %917 = vmatpush1.msra.mxu0 %v626
    %918 = vmatprep.subr.mxu0 0.0
    %919 = vmatpush1.msra.mxu0 %v629
    %920 = vmatprep.subr.mxu0 0.0
    %921 = vmatpush1.msra.mxu0 %v632
    %922 = vmatprep.subr.mxu0 0.0
    %923 = vmatpush1.msra.mxu0 %v635
    %924 = vmatprep.subr.mxu0 0.0
    %925 = vmatpush1.msra.mxu0 %v638
    %926 = vmatprep.subr.mxu0 0.0
    %927 = vmatpush1.msra.mxu0 %v641
    %928 = vmatprep.subr.mxu0 0.0
    %929 = vmatpush1.msra.mxu0 %v644
    %930 = vmatprep.subr.mxu0 0.0
    %931 = vmatpush1.msra.mxu0 %v647
    %932 = vmatprep.subr.mxu0 0.0
    %933 = vmatpush1.msra.mxu0 %v650
    %934 = vmatprep.subr.mxu0 0.0
    %935 = vmatpush1.msra.mxu0 %v653
    %936 = vmatprep.subr.mxu0 0.0
    %937 = vmatpush1.msra.mxu0 %v656
    %938 = vmatprep.subr.mxu0 0.0
    %939 = vmatpush1.msra.mxu0 %v659
    %940 = vmatprep.subr.mxu0 0.0
    %941 = vmatpush1.msra.mxu0 %v662
    %942 = vmatprep.subr.mxu0 0.0
    %943 = vmatpush1.msra.mxu0 0.0
    %944 = vmatprep.subr.mxu0 0.0
    %945 = vmatpush1.msra.mxu0 0.0
    %946 = vmatprep.subr.mxu0 0.0
    %947 = vmatpush1.msra.mxu0 0.0
    %948 = vmatprep.subr.mxu0 0.0
    %949 = vmatpush1.msra.mxu0 0.0
    %950 = vmatprep.subr.mxu0 0.0
    %951 = vmatpush1.msra.mxu0 0.0
    %952 = vmatprep.subr.mxu0 0.0
    %953 = vmatpush1.msra.mxu0 0.0
    %954 = vmatprep.subr.mxu0 0.0
    %955 = vmatpush1.msra.mxu0 0.0
    %956 = vmatprep.subr.mxu0 0.0
    %957 = vmatpush1.msra.mxu0 0.0
    %958 = vmatprep.subr.mxu0 0.0
    %959 = vmatpush1.msra.mxu0 0.0
    %960 = vmatprep.subr.mxu0 0.0
    %961 = vmatpush1.msra.mxu0 0.0
    %962 = vmatprep.subr.mxu0 0.0
    %963 = vmatpush1.msra.mxu0 0.0
    %964 = vmatprep.subr.mxu0 0.0
    %965 = vmatpush1.msra.mxu0 0.0
    %966 = vmatprep.subr.mxu0 0.0
    %967 = vmatpush1.msra.mxu0 0.0
    %968 = vmatprep.subr.mxu0 0.0
    %969 = vmatpush1.msra.mxu0 0.0
    %970 = vmatprep.subr.mxu0 0.0
    %971 = vmatpush1.msra.mxu0 0.0
    %972 = vmatprep.subr.mxu0 0.0
    %973 = vmatpush1.msra.mxu0 0.0
    %974 = vmatprep.mubr.f32.mxu0 0.0
    %975 = vmatmul.mubr.f32.gmra.mrb[0].mxu0 %v834
    %v976 = vpop.f32.mrb[0].mxu0
    %v977 = vadd.f32 0.0, %v976
    %v978 = vpop.f32.mrb[0].mxu0
    %979 = vdwg.mxu0
    %v980 = vadd.f32 %v836, %v906
    %v981 = vadd.f32 %v837, %v908
    %v982 = vxor.u32 %v980, 2147483648
    %v983 = vxor.u32 %v981, 2147483648
    %v984 = vmul.f32 %v982, 1.442695
    %v985 = vpow.pop %v984
    %v986 = vmul.f32 %v983, 1.442695
    %v987 = vpow.pop %v986
    %v988 = vadd.f32 %v985, 1.0
    %v989 = vadd.f32 %v987, 1.0
    %v990 = vrcp.pop %v988
    %v991 = vmul.f32 1.0, %v990
    %v992 = vrcp.pop %v989
    %v993 = vmul.f32 1.0, %v992
    %v994 = vadd.f32 %v977, %v826
    %v995 = vmul.f32 %v991, %v994
    %v996 = vadd.f32 %v838, %v995
    %v997 = vtanh.pop %v996
    %v998 = vsub.f32 %v834, %v997
    %v999 = vmul.f32 %v993, %v998
    %v1000 = vadd.f32 %v997, %v999
    %s1001 = scalar_lea.vmem [#allocation2], 48
    %v1002 = vld [vmem:[%s1001] sm:$0xff]
    %v1003 = vld [vmem:[%s1001 + $0x8] sm:$0xff]
    %v1004 = vld [vmem:[%s1001 + $0x10] sm:$0xff]
    %1005 = vmatprep.subr.mxu0 %v616
    %1006 = vmatpush1.msra.mxu0 %v615
    %1007 = vmatprep.subr.mxu0 %v619
    %1008 = vmatpush1.msra.mxu0 %v618
    %1009 = vmatprep.subr.mxu0 %v622
    %1010 = vmatpush1.msra.mxu0 %v621
    %1011 = vmatprep.subr.mxu0 %v625
    %1012 = vmatpush1.msra.mxu0 %v624
    %1013 = vmatprep.subr.mxu0 %v628
    %1014 = vmatpush1.msra.mxu0 %v627
    %1015 = vmatprep.subr.mxu0 %v631
    %1016 = vmatpush1.msra.mxu0 %v630
    %1017 = vmatprep.subr.mxu0 %v634
    %1018 = vmatpush1.msra.mxu0 %v633
    %1019 = vmatprep.subr.mxu0 %v637
    %1020 = vmatpush1.msra.mxu0 %v636
    %1021 = vmatprep.subr.mxu0 %v640
    %1022 = vmatpush1.msra.mxu0 %v639
    %1023 = vmatprep.subr.mxu0 %v643
    %1024 = vmatpush1.msra.mxu0 %v642
    %1025 = vmatprep.subr.mxu0 %v646
    %1026 = vmatpush1.msra.mxu0 %v645
    %1027 = vmatprep.subr.mxu0 %v649
    %1028 = vmatpush1.msra.mxu0 %v648
    %1029 = vmatprep.subr.mxu0 %v652
    %1030 = vmatpush1.msra.mxu0 %v651
    %1031 = vmatprep.subr.mxu0 %v655
    %1032 = vmatpush1.msra.mxu0 %v654
    %1033 = vmatprep.subr.mxu0 %v658
    %1034 = vmatpush1.msra.mxu0 %v657
    %1035 = vmatprep.subr.mxu0 %v661
    %1036 = vmatpush1.msra.mxu0 %v660
    %1037 = vmatprep.subr.mxu0 0.0
    %1038 = vmatpush1.msra.mxu0 0.0
    %1039 = vmatprep.subr.mxu0 0.0
    %1040 = vmatpush1.msra.mxu0 0.0
    %1041 = vmatprep.subr.mxu0 0.0
    %1042 = vmatpush1.msra.mxu0 0.0
    %1043 = vmatprep.subr.mxu0 0.0
    %1044 = vmatpush1.msra.mxu0 0.0
    %1045 = vmatprep.subr.mxu0 0.0
    %1046 = vmatpush1.msra.mxu0 0.0
    %1047 = vmatprep.subr.mxu0 0.0
    %1048 = vmatpush1.msra.mxu0 0.0
    %1049 = vmatprep.subr.mxu0 0.0
    %1050 = vmatpush1.msra.mxu0 0.0
    %1051 = vmatprep.subr.mxu0 0.0
    %1052 = vmatpush1.msra.mxu0 0.0
    %1053 = vmatprep.subr.mxu0 0.0
    %1054 = vmatpush1.msra.mxu0 0.0
    %1055 = vmatprep.subr.mxu0 0.0
    %1056 = vmatpush1.msra.mxu0 0.0
    %1057 = vmatprep.subr.mxu0 0.0
    %1058 = vmatpush1.msra.mxu0 0.0
    %1059 = vmatprep.subr.mxu0 0.0
    %1060 = vmatpush1.msra.mxu0 0.0
    %1061 = vmatprep.subr.mxu0 0.0
    %1062 = vmatpush1.msra.mxu0 0.0
    %1063 = vmatprep.subr.mxu0 0.0
    %1064 = vmatpush1.msra.mxu0 0.0
    %1065 = vmatprep.subr.mxu0 0.0
    %1066 = vmatpush1.msra.mxu0 0.0
    %1067 = vmatprep.subr.mxu0 0.0
    %1068 = vmatpush1.msra.mxu0 0.0
    %1069 = vmatprep.mubr.f32.mxu0 0.0
    %1070 = vmatmul.mubr.f32.gmra.mrb[0].mxu0 %v1000
    %v1071 = vpop.f32.mrb[0].mxu0
    %v1072 = vadd.f32 0.0, %v1071
    %v1073 = vpop.f32.mrb[0].mxu0
    %v1074 = vadd.f32 0.0, %v1073
    %1075 = vdwg.mxu0
    %1076 = vmatprep.subr.mxu0 0.0
    %1077 = vmatpush1.msra.mxu0 %v617
    %1078 = vmatprep.subr.mxu0 0.0
    %1079 = vmatpush1.msra.mxu0 %v620
    %1080 = vmatprep.subr.mxu0 0.0
    %1081 = vmatpush1.msra.mxu0 %v623
    %1082 = vmatprep.subr.mxu0 0.0
    %1083 = vmatpush1.msra.mxu0 %v626
    %1084 = vmatprep.subr.mxu0 0.0
    %1085 = vmatpush1.msra.mxu0 %v629
    %1086 = vmatprep.subr.mxu0 0.0
    %1087 = vmatpush1.msra.mxu0 %v632
    %1088 = vmatprep.subr.mxu0 0.0
    %1089 = vmatpush1.msra.mxu0 %v635
    %1090 = vmatprep.subr.mxu0 0.0
    %1091 = vmatpush1.msra.mxu0 %v638
    %1092 = vmatprep.subr.mxu0 0.0
    %1093 = vmatpush1.msra.mxu0 %v641
    %1094 = vmatprep.subr.mxu0 0.0
    %1095 = vmatpush1.msra.mxu0 %v644
    %1096 = vmatprep.subr.mxu0 0.0
    %1097 = vmatpush1.msra.mxu0 %v647
    %1098 = vmatprep.subr.mxu0 0.0
    %1099 = vmatpush1.msra.mxu0 %v650
    %1100 = vmatprep.subr.mxu0 0.0
    %1101 = vmatpush1.msra.mxu0 %v653
    %1102 = vmatprep.subr.mxu0 0.0
    %1103 = vmatpush1.msra.mxu0 %v656
    %1104 = vmatprep.subr.mxu0 0.0
    %1105 = vmatpush1.msra.mxu0 %v659
    %1106 = vmatprep.subr.mxu0 0.0
    %1107 = vmatpush1.msra.mxu0 %v662
    %1108 = vmatprep.subr.mxu0 0.0
    %1109 = vmatpush1.msra.mxu0 0.0
    %1110 = vmatprep.subr.mxu0 0.0
    %1111 = vmatpush1.msra.mxu0 0.0
    %1112 = vmatprep.subr.mxu0 0.0
    %1113 = vmatpush1.msra.mxu0 0.0
    %1114 = vmatprep.subr.mxu0 0.0
    %1115 = vmatpush1.msra.mxu0 0.0
    %1116 = vmatprep.subr.mxu0 0.0
    %1117 = vmatpush1.msra.mxu0 0.0
    %1118 = vmatprep.subr.mxu0 0.0
    %1119 = vmatpush1.msra.mxu0 0.0
    %1120 = vmatprep.subr.mxu0 0.0
    %1121 = vmatpush1.msra.mxu0 0.0
    %1122 = vmatprep.subr.mxu0 0.0
    %1123 = vmatpush1.msra.mxu0 0.0
    %1124 = vmatprep.subr.mxu0 0.0
    %1125 = vmatpush1.msra.mxu0 0.0
    %1126 = vmatprep.subr.mxu0 0.0
    %1127 = vmatpush1.msra.mxu0 0.0
    %1128 = vmatprep.subr.mxu0 0.0
    %1129 = vmatpush1.msra.mxu0 0.0
    %1130 = vmatprep.subr.mxu0 0.0
    %1131 = vmatpush1.msra.mxu0 0.0
    %1132 = vmatprep.subr.mxu0 0.0
    %1133 = vmatpush1.msra.mxu0 0.0
    %1134 = vmatprep.subr.mxu0 0.0
    %1135 = vmatpush1.msra.mxu0 0.0
    %1136 = vmatprep.subr.mxu0 0.0
    %1137 = vmatpush1.msra.mxu0 0.0
    %1138 = vmatprep.subr.mxu0 0.0
    %1139 = vmatpush1.msra.mxu0 0.0
    %1140 = vmatprep.mubr.f32.mxu0 0.0
    %1141 = vmatmul.mubr.f32.gmra.mrb[0].mxu0 %v1000
    %v1142 = vpop.f32.mrb[0].mxu0
    %v1143 = vadd.f32 0.0, %v1142
    %v1144 = vpop.f32.mrb[0].mxu0
    %1145 = vdwg.mxu0
    %v1146 = vadd.f32 %v1002, %v1072
    %v1147 = vadd.f32 %v1003, %v1074
    %v1148 = vxor.u32 %v1146, 2147483648
    %v1149 = vxor.u32 %v1147, 2147483648
    %v1150 = vmul.f32 %v1148, 1.442695
    %v1151 = vpow.pop %v1150
    %v1152 = vmul.f32 %v1149, 1.442695
    %v1153 = vpow.pop %v1152
    %v1154 = vadd.f32 %v1151, 1.0
    %v1155 = vadd.f32 %v1153, 1.0
    %v1156 = vrcp.pop %v1154
    %v1157 = vmul.f32 1.0, %v1156
    %v1158 = vrcp.pop %v1155
    %v1159 = vmul.f32 1.0, %v1158
    %v1160 = vadd.f32 %v1143, %v826
    %v1161 = vmul.f32 %v1157, %v1160
    %v1162 = vadd.f32 %v1004, %v1161
    %v1163 = vtanh.pop %v1162
    %v1164 = vsub.f32 %v1000, %v1163
    %v1165 = vmul.f32 %v1159, %v1164
    %v1166 = vadd.f32 %v1163, %v1165
    %s1167 = scalar_lea.vmem [#allocation2], 72
    %v1168 = vld [vmem:[%s1167] sm:$0xff]
    %v1169 = vld [vmem:[%s1167 + $0x8] sm:$0xff]
    %v1170 = vld [vmem:[%s1167 + $0x10] sm:$0xff]
    %1171 = vmatprep.subr.mxu0 %v616
    %1172 = vmatpush1.msra.mxu0 %v615
    %1173 = vmatprep.subr.mxu0 %v619
    %1174 = vmatpush1.msra.mxu0 %v618
    %1175 = vmatprep.subr.mxu0 %v622
    %1176 = vmatpush1.msra.mxu0 %v621
    %1177 = vmatprep.subr.mxu0 %v625
    %1178 = vmatpush1.msra.mxu0 %v624
    %1179 = vmatprep.subr.mxu0 %v628
    %1180 = vmatpush1.msra.mxu0 %v627
    %1181 = vmatprep.subr.mxu0 %v631
    %1182 = vmatpush1.msra.mxu0 %v630
    %1183 = vmatprep.subr.mxu0 %v634
    %1184 = vmatpush1.msra.mxu0 %v633
    %1185 = vmatprep.subr.mxu0 %v637
    %1186 = vmatpush1.msra.mxu0 %v636
    %1187 = vmatprep.subr.mxu0 %v640
    %1188 = vmatpush1.msra.mxu0 %v639
    %1189 = vmatprep.subr.mxu0 %v643
    %1190 = vmatpush1.msra.mxu0 %v642
    %1191 = vmatprep.subr.mxu0 %v646
    %1192 = vmatpush1.msra.mxu0 %v645
    %1193 = vmatprep.subr.mxu0 %v649
    %1194 = vmatpush1.msra.mxu0 %v648
    %1195 = vmatprep.subr.mxu0 %v652
    %1196 = vmatpush1.msra.mxu0 %v651
    %1197 = vmatprep.subr.mxu0 %v655
    %1198 = vmatpush1.msra.mxu0 %v654
    %1199 = vmatprep.subr.mxu0 %v658
    %1200 = vmatpush1.msra.mxu0 %v657
    %1201 = vmatprep.subr.mxu0 %v661
    %1202 = vmatpush1.msra.mxu0 %v660
    %1203 = vmatprep.subr.mxu0 0.0
    %1204 = vmatpush1.msra.mxu0 0.0
    %1205 = vmatprep.subr.mxu0 0.0
    %1206 = vmatpush1.msra.mxu0 0.0
    %1207 = vmatprep.subr.mxu0 0.0
    %1208 = vmatpush1.msra.mxu0 0.0
    %1209 = vmatprep.subr.mxu0 0.0
    %1210 = vmatpush1.msra.mxu0 0.0
    %1211 = vmatprep.subr.mxu0 0.0
    %1212 = vmatpush1.msra.mxu0 0.0
    %1213 = vmatprep.subr.mxu0 0.0
    %1214 = vmatpush1.msra.mxu0 0.0
    %1215 = vmatprep.subr.mxu0 0.0
    %1216 = vmatpush1.msra.mxu0 0.0
    %1217 = vmatprep.subr.mxu0 0.0
    %1218 = vmatpush1.msra.mxu0 0.0
    %1219 = vmatprep.subr.mxu0 0.0
    %1220 = vmatpush1.msra.mxu0 0.0
    %1221 = vmatprep.subr.mxu0 0.0
    %1222 = vmatpush1.msra.mxu0 0.0
    %1223 = vmatprep.subr.mxu0 0.0
    %1224 = vmatpush1.msra.mxu0 0.0
    %1225 = vmatprep.subr.mxu0 0.0
    %1226 = vmatpush1.msra.mxu0 0.0
    %1227 = vmatprep.subr.mxu0 0.0
    %1228 = vmatpush1.msra.mxu0 0.0
    %1229 = vmatprep.subr.mxu0 0.0
    %1230 = vmatpush1.msra.mxu0 0.0
    %1231 = vmatprep.subr.mxu0 0.0
    %1232 = vmatpush1.msra.mxu0 0.0
    %1233 = vmatprep.subr.mxu0 0.0
    %1234 = vmatpush1.msra.mxu0 0.0
    %1235 = vmatprep.mubr.f32.mxu0 0.0
    %1236 = vmatmul.mubr.f32.gmra.mrb[0].mxu0 %v1166
    %v1237 = vpop.f32.mrb[0].mxu0
    %v1238 = vadd.f32 0.0, %v1237
    %v1239 = vpop.f32.mrb[0].mxu0
    %v1240 = vadd.f32 0.0, %v1239
    %1241 = vdwg.mxu0
    %1242 = vmatprep.subr.mxu0 0.0
    %1243 = vmatpush1.msra.mxu0 %v617
    %1244 = vmatprep.subr.mxu0 0.0
    %1245 = vmatpush1.msra.mxu0 %v620
    %1246 = vmatprep.subr.mxu0 0.0
    %1247 = vmatpush1.msra.mxu0 %v623
    %1248 = vmatprep.subr.mxu0 0.0
    %1249 = vmatpush1.msra.mxu0 %v626
    %1250 = vmatprep.subr.mxu0 0.0
    %1251 = vmatpush1.msra.mxu0 %v629
    %1252 = vmatprep.subr.mxu0 0.0
    %1253 = vmatpush1.msra.mxu0 %v632
    %1254 = vmatprep.subr.mxu0 0.0
    %1255 = vmatpush1.msra.mxu0 %v635
    %1256 = vmatprep.subr.mxu0 0.0
    %1257 = vmatpush1.msra.mxu0 %v638
    %1258 = vmatprep.subr.mxu0 0.0
    %1259 = vmatpush1.msra.mxu0 %v641
    %1260 = vmatprep.subr.mxu0 0.0
    %1261 = vmatpush1.msra.mxu0 %v644
    %1262 = vmatprep.subr.mxu0 0.0
    %1263 = vmatpush1.msra.mxu0 %v647
    %1264 = vmatprep.subr.mxu0 0.0
    %1265 = vmatpush1.msra.mxu0 %v650
    %1266 = vmatprep.subr.mxu0 0.0
    %1267 = vmatpush1.msra.mxu0 %v653
    %1268 = vmatprep.subr.mxu0 0.0
    %1269 = vmatpush1.msra.mxu0 %v656
    %1270 = vmatprep.subr.mxu0 0.0
    %1271 = vmatpush1.msra.mxu0 %v659
    %1272 = vmatprep.subr.mxu0 0.0
    %1273 = vmatpush1.msra.mxu0 %v662
    %1274 = vmatprep.subr.mxu0 0.0
    %1275 = vmatpush1.msra.mxu0 0.0
    %1276 = vmatprep.subr.mxu0 0.0
    %1277 = vmatpush1.msra.mxu0 0.0
    %1278 = vmatprep.subr.mxu0 0.0
    %1279 = vmatpush1.msra.mxu0 0.0
    %1280 = vmatprep.subr.mxu0 0.0
    %1281 = vmatpush1.msra.mxu0 0.0
    %1282 = vmatprep.subr.mxu0 0.0
    %1283 = vmatpush1.msra.mxu0 0.0
    %1284 = vmatprep.subr.mxu0 0.0
    %1285 = vmatpush1.msra.mxu0 0.0
    %1286 = vmatprep.subr.mxu0 0.0
    %1287 = vmatpush1.msra.mxu0 0.0
    %1288 = vmatprep.subr.mxu0 0.0
    %1289 = vmatpush1.msra.mxu0 0.0
    %1290 = vmatprep.subr.mxu0 0.0
    %1291 = vmatpush1.msra.mxu0 0.0
    %1292 = vmatprep.subr.mxu0 0.0
    %1293 = vmatpush1.msra.mxu0 0.0
    %1294 = vmatprep.subr.mxu0 0.0
    %1295 = vmatpush1.msra.mxu0 0.0
    %1296 = vmatprep.subr.mxu0 0.0
    %1297 = vmatpush1.msra.mxu0 0.0
    %1298 = vmatprep.subr.mxu0 0.0
    %1299 = vmatpush1.msra.mxu0 0.0
    %1300 = vmatprep.subr.mxu0 0.0
    %1301 = vmatpush1.msra.mxu0 0.0
    %1302 = vmatprep.subr.mxu0 0.0
    %1303 = vmatpush1.msra.mxu0 0.0
    %1304 = vmatprep.subr.mxu0 0.0
    %1305 = vmatpush1.msra.mxu0 0.0
    %1306 = vmatprep.mubr.f32.mxu0 0.0
    %1307 = vmatmul.mubr.f32.gmra.mrb[0].mxu0 %v1166
    %v1308 = vpop.f32.mrb[0].mxu0
    %v1309 = vadd.f32 0.0, %v1308
    %v1310 = vpop.f32.mrb[0].mxu0
    %1311 = vdwg.mxu0
    %v1312 = vadd.f32 %v1168, %v1238
    %v1313 = vadd.f32 %v1169, %v1240
    %v1314 = vxor.u32 %v1312, 2147483648
    %v1315 = vxor.u32 %v1313, 2147483648
    %v1316 = vmul.f32 %v1314, 1.442695
    %v1317 = vpow.pop %v1316
    %v1318 = vmul.f32 %v1315, 1.442695
    %v1319 = vpow.pop %v1318
    %v1320 = vadd.f32 %v1317, 1.0
    %v1321 = vadd.f32 %v1319, 1.0
    %v1322 = vrcp.pop %v1320
    %v1323 = vmul.f32 1.0, %v1322
    %v1324 = vrcp.pop %v1321
    %v1325 = vmul.f32 1.0, %v1324
    %v1326 = vadd.f32 %v1309, %v826
    %v1327 = vmul.f32 %v1323, %v1326
    %v1328 = vadd.f32 %v1170, %v1327
    %v1329 = vtanh.pop %v1328
    %v1330 = vsub.f32 %v1166, %v1329
    %v1331 = vmul.f32 %v1325, %v1330
    %v1332 = vadd.f32 %v1329, %v1331
    %s1333 = scalar_lea.vmem [#allocation2], 96
    %v1334 = vld [vmem:[%s1333] sm:$0xff]
    %v1335 = vld [vmem:[%s1333 + $0x8] sm:$0xff]
    %v1336 = vld [vmem:[%s1333 + $0x10] sm:$0xff]
    %1337 = vmatprep.subr.mxu0 %v616
    %1338 = vmatpush1.msra.mxu0 %v615
    %1339 = vmatprep.subr.mxu0 %v619
    %1340 = vmatpush1.msra.mxu0 %v618
    %1341 = vmatprep.subr.mxu0 %v622
    %1342 = vmatpush1.msra.mxu0 %v621
    %1343 = vmatprep.subr.mxu0 %v625
    %1344 = vmatpush1.msra.mxu0 %v624
    %1345 = vmatprep.subr.mxu0 %v628
    %1346 = vmatpush1.msra.mxu0 %v627
    %1347 = vmatprep.subr.mxu0 %v631
    %1348 = vmatpush1.msra.mxu0 %v630
    %1349 = vmatprep.subr.mxu0 %v634
    %1350 = vmatpush1.msra.mxu0 %v633
    %1351 = vmatprep.subr.mxu0 %v637
    %1352 = vmatpush1.msra.mxu0 %v636
    %1353 = vmatprep.subr.mxu0 %v640
    %1354 = vmatpush1.msra.mxu0 %v639
    %1355 = vmatprep.subr.mxu0 %v643
    %1356 = vmatpush1.msra.mxu0 %v642
    %1357 = vmatprep.subr.mxu0 %v646
    %1358 = vmatpush1.msra.mxu0 %v645
    %1359 = vmatprep.subr.mxu0 %v649
    %1360 = vmatpush1.msra.mxu0 %v648
    %1361 = vmatprep.subr.mxu0 %v652
    %1362 = vmatpush1.msra.mxu0 %v651
    %1363 = vmatprep.subr.mxu0 %v655
    %1364 = vmatpush1.msra.mxu0 %v654
    %1365 = vmatprep.subr.mxu0 %v658
    %1366 = vmatpush1.msra.mxu0 %v657
    %1367 = vmatprep.subr.mxu0 %v661
    %1368 = vmatpush1.msra.mxu0 %v660
    %1369 = vmatprep.subr.mxu0 0.0
    %1370 = vmatpush1.msra.mxu0 0.0
    %1371 = vmatprep.subr.mxu0 0.0
    %1372 = vmatpush1.msra.mxu0 0.0
    %1373 = vmatprep.subr.mxu0 0.0
    %1374 = vmatpush1.msra.mxu0 0.0
    %1375 = vmatprep.subr.mxu0 0.0
    %1376 = vmatpush1.msra.mxu0 0.0
    %1377 = vmatprep.subr.mxu0 0.0
    %1378 = vmatpush1.msra.mxu0 0.0
    %1379 = vmatprep.subr.mxu0 0.0
    %1380 = vmatpush1.msra.mxu0 0.0
    %1381 = vmatprep.subr.mxu0 0.0
    %1382 = vmatpush1.msra.mxu0 0.0
    %1383 = vmatprep.subr.mxu0 0.0
    %1384 = vmatpush1.msra.mxu0 0.0
    %1385 = vmatprep.subr.mxu0 0.0
    %1386 = vmatpush1.msra.mxu0 0.0
    %1387 = vmatprep.subr.mxu0 0.0
    %1388 = vmatpush1.msra.mxu0 0.0
    %1389 = vmatprep.subr.mxu0 0.0
    %1390 = vmatpush1.msra.mxu0 0.0
    %1391 = vmatprep.subr.mxu0 0.0
    %1392 = vmatpush1.msra.mxu0 0.0
    %1393 = vmatprep.subr.mxu0 0.0
    %1394 = vmatpush1.msra.mxu0 0.0
    %1395 = vmatprep.subr.mxu0 0.0
    %1396 = vmatpush1.msra.mxu0 0.0
    %1397 = vmatprep.subr.mxu0 0.0
    %1398 = vmatpush1.msra.mxu0 0.0
    %1399 = vmatprep.subr.mxu0 0.0
    %1400 = vmatpush1.msra.mxu0 0.0
    %1401 = vmatprep.mubr.f32.mxu0 0.0
    %1402 = vmatmul.mubr.f32.gmra.mrb[0].mxu0 %v1332
    %v1403 = vpop.f32.mrb[0].mxu0
    %v1404 = vadd.f32 0.0, %v1403
    %v1405 = vpop.f32.mrb[0].mxu0
    %v1406 = vadd.f32 0.0, %v1405
    %1407 = vdwg.mxu0
    %1408 = vmatprep.subr.mxu0 0.0
    %1409 = vmatpush1.msra.mxu0 %v617
    %1410 = vmatprep.subr.mxu0 0.0
    %1411 = vmatpush1.msra.mxu0 %v620
    %1412 = vmatprep.subr.mxu0 0.0
    %1413 = vmatpush1.msra.mxu0 %v623
    %1414 = vmatprep.subr.mxu0 0.0
    %1415 = vmatpush1.msra.mxu0 %v626
    %1416 = vmatprep.subr.mxu0 0.0
    %1417 = vmatpush1.msra.mxu0 %v629
    %1418 = vmatprep.subr.mxu0 0.0
    %1419 = vmatpush1.msra.mxu0 %v632
    %1420 = vmatprep.subr.mxu0 0.0
    %1421 = vmatpush1.msra.mxu0 %v635
    %1422 = vmatprep.subr.mxu0 0.0
    %1423 = vmatpush1.msra.mxu0 %v638
    %1424 = vmatprep.subr.mxu0 0.0
    %1425 = vmatpush1.msra.mxu0 %v641
    %1426 = vmatprep.subr.mxu0 0.0
    %1427 = vmatpush1.msra.mxu0 %v644
    %1428 = vmatprep.subr.mxu0 0.0
    %1429 = vmatpush1.msra.mxu0 %v647
    %1430 = vmatprep.subr.mxu0 0.0
    %1431 = vmatpush1.msra.mxu0 %v650
    %1432 = vmatprep.subr.mxu0 0.0
    %1433 = vmatpush1.msra.mxu0 %v653
    %1434 = vmatprep.subr.mxu0 0.0
    %1435 = vmatpush1.msra.mxu0 %v656
    %1436 = vmatprep.subr.mxu0 0.0
    %1437 = vmatpush1.msra.mxu0 %v659
    %1438 = vmatprep.subr.mxu0 0.0
    %1439 = vmatpush1.msra.mxu0 %v662
    %1440 = vmatprep.subr.mxu0 0.0
    %1441 = vmatpush1.msra.mxu0 0.0
    %1442 = vmatprep.subr.mxu0 0.0
    %1443 = vmatpush1.msra.mxu0 0.0
    %1444 = vmatprep.subr.mxu0 0.0
    %1445 = vmatpush1.msra.mxu0 0.0
    %1446 = vmatprep.subr.mxu0 0.0
    %1447 = vmatpush1.msra.mxu0 0.0
    %1448 = vmatprep.subr.mxu0 0.0
    %1449 = vmatpush1.msra.mxu0 0.0
    %1450 = vmatprep.subr.mxu0 0.0
    %1451 = vmatpush1.msra.mxu0 0.0
    %1452 = vmatprep.subr.mxu0 0.0
    %1453 = vmatpush1.msra.mxu0 0.0
    %1454 = vmatprep.subr.mxu0 0.0
    %1455 = vmatpush1.msra.mxu0 0.0
    %1456 = vmatprep.subr.mxu0 0.0
    %1457 = vmatpush1.msra.mxu0 0.0
    %1458 = vmatprep.subr.mxu0 0.0
    %1459 = vmatpush1.msra.mxu0 0.0
    %1460 = vmatprep.subr.mxu0 0.0
    %1461 = vmatpush1.msra.mxu0 0.0
    %1462 = vmatprep.subr.mxu0 0.0
    %1463 = vmatpush1.msra.mxu0 0.0
    %1464 = vmatprep.subr.mxu0 0.0
    %1465 = vmatpush1.msra.mxu0 0.0
    %1466 = vmatprep.subr.mxu0 0.0
    %1467 = vmatpush1.msra.mxu0 0.0
    %1468 = vmatprep.subr.mxu0 0.0
    %1469 = vmatpush1.msra.mxu0 0.0
    %1470 = vmatprep.subr.mxu0 0.0
    %1471 = vmatpush1.msra.mxu0 0.0
    %1472 = vmatprep.mubr.f32.mxu0 0.0
    %1473 = vmatmul.mubr.f32.gmra.mrb[0].mxu0 %v1332
    %v1474 = vpop.f32.mrb[0].mxu0
    %v1475 = vadd.f32 0.0, %v1474
    %v1476 = vpop.f32.mrb[0].mxu0
    %1477 = vdwg.mxu0
    %v1478 = vadd.f32 %v1334, %v1404
    %v1479 = vadd.f32 %v1335, %v1406
    %v1480 = vxor.u32 %v1478, 2147483648
    %v1481 = vxor.u32 %v1479, 2147483648
    %v1482 = vmul.f32 %v1480, 1.442695
    %v1483 = vpow.pop %v1482
    %v1484 = vmul.f32 %v1481, 1.442695
    %v1485 = vpow.pop %v1484
    %v1486 = vadd.f32 %v1483, 1.0
    %v1487 = vadd.f32 %v1485, 1.0
    %v1488 = vrcp.pop %v1486
    %v1489 = vmul.f32 1.0, %v1488
    %v1490 = vrcp.pop %v1487
    %v1491 = vmul.f32 1.0, %v1490
    %v1492 = vadd.f32 %v1475, %v826
    %v1493 = vmul.f32 %v1489, %v1492
    %v1494 = vadd.f32 %v1336, %v1493
    %v1495 = vtanh.pop %v1494
    %v1496 = vsub.f32 %v1332, %v1495
    %v1497 = vmul.f32 %v1491, %v1496
    %v1498 = vadd.f32 %v1495, %v1497
    %s1499 = scalar_lea.vmem [#allocation2], 120
    %v1500 = vld [vmem:[%s1499] sm:$0xff]
    %v1501 = vld [vmem:[%s1499 + $0x8] sm:$0xff]
    %v1502 = vld [vmem:[%s1499 + $0x10] sm:$0xff]
    %1503 = vmatprep.subr.mxu0 %v616
    %1504 = vmatpush1.msra.mxu0 %v615
    %1505 = vmatprep.subr.mxu0 %v619
    %1506 = vmatpush1.msra.mxu0 %v618
    %1507 = vmatprep.subr.mxu0 %v622
    %1508 = vmatpush1.msra.mxu0 %v621
    %1509 = vmatprep.subr.mxu0 %v625
    %1510 = vmatpush1.msra.mxu0 %v624
    %1511 = vmatprep.subr.mxu0 %v628
    %1512 = vmatpush1.msra.mxu0 %v627
    %1513 = vmatprep.subr.mxu0 %v631
    %1514 = vmatpush1.msra.mxu0 %v630
    %1515 = vmatprep.subr.mxu0 %v634
    %1516 = vmatpush1.msra.mxu0 %v633
    %1517 = vmatprep.subr.mxu0 %v637
    %1518 = vmatpush1.msra.mxu0 %v636
    %1519 = vmatprep.subr.mxu0 %v640
    %1520 = vmatpush1.msra.mxu0 %v639
    %1521 = vmatprep.subr.mxu0 %v643
    %1522 = vmatpush1.msra.mxu0 %v642
    %1523 = vmatprep.subr.mxu0 %v646
    %1524 = vmatpush1.msra.mxu0 %v645
    %1525 = vmatprep.subr.mxu0 %v649
    %1526 = vmatpush1.msra.mxu0 %v648
    %1527 = vmatprep.subr.mxu0 %v652
    %1528 = vmatpush1.msra.mxu0 %v651
    %1529 = vmatprep.subr.mxu0 %v655
    %1530 = vmatpush1.msra.mxu0 %v654
    %1531 = vmatprep.subr.mxu0 %v658
    %1532 = vmatpush1.msra.mxu0 %v657
    %1533 = vmatprep.subr.mxu0 %v661
    %1534 = vmatpush1.msra.mxu0 %v660
    %1535 = vmatprep.subr.mxu0 0.0
    %1536 = vmatpush1.msra.mxu0 0.0
    %1537 = vmatprep.subr.mxu0 0.0
    %1538 = vmatpush1.msra.mxu0 0.0
    %1539 = vmatprep.subr.mxu0 0.0
    %1540 = vmatpush1.msra.mxu0 0.0
    %1541 = vmatprep.subr.mxu0 0.0
    %1542 = vmatpush1.msra.mxu0 0.0
    %1543 = vmatprep.subr.mxu0 0.0
    %1544 = vmatpush1.msra.mxu0 0.0
    %1545 = vmatprep.subr.mxu0 0.0
    %1546 = vmatpush1.msra.mxu0 0.0
    %1547 = vmatprep.subr.mxu0 0.0
    %1548 = vmatpush1.msra.mxu0 0.0
    %1549 = vmatprep.subr.mxu0 0.0
    %1550 = vmatpush1.msra.mxu0 0.0
    %1551 = vmatprep.subr.mxu0 0.0
    %1552 = vmatpush1.msra.mxu0 0.0
    %1553 = vmatprep.subr.mxu0 0.0
    %1554 = vmatpush1.msra.mxu0 0.0
    %1555 = vmatprep.subr.mxu0 0.0
    %1556 = vmatpush1.msra.mxu0 0.0
    %1557 = vmatprep.subr.mxu0 0.0
    %1558 = vmatpush1.msra.mxu0 0.0
    %1559 = vmatprep.subr.mxu0 0.0
    %1560 = vmatpush1.msra.mxu0 0.0
    %1561 = vmatprep.subr.mxu0 0.0
    %1562 = vmatpush1.msra.mxu0 0.0
    %1563 = vmatprep.subr.mxu0 0.0
    %1564 = vmatpush1.msra.mxu0 0.0
    %1565 = vmatprep.subr.mxu0 0.0
    %1566 = vmatpush1.msra.mxu0 0.0
    %1567 = vmatprep.mubr.f32.mxu0 0.0
    %1568 = vmatmul.mubr.f32.gmra.mrb[0].mxu0 %v1498
    %v1569 = vpop.f32.mrb[0].mxu0
    %v1570 = vadd.f32 0.0, %v1569
    %v1571 = vpop.f32.mrb[0].mxu0
    %v1572 = vadd.f32 0.0, %v1571
    %1573 = vdwg.mxu0
    %1574 = vmatprep.subr.mxu0 0.0
    %1575 = vmatpush1.msra.mxu0 %v617
    %1576 = vmatprep.subr.mxu0 0.0
    %1577 = vmatpush1.msra.mxu0 %v620
    %1578 = vmatprep.subr.mxu0 0.0
    %1579 = vmatpush1.msra.mxu0 %v623
    %1580 = vmatprep.subr.mxu0 0.0
    %1581 = vmatpush1.msra.mxu0 %v626
    %1582 = vmatprep.subr.mxu0 0.0
    %1583 = vmatpush1.msra.mxu0 %v629
    %1584 = vmatprep.subr.mxu0 0.0
    %1585 = vmatpush1.msra.mxu0 %v632
    %1586 = vmatprep.subr.mxu0 0.0
    %1587 = vmatpush1.msra.mxu0 %v635
    %1588 = vmatprep.subr.mxu0 0.0
    %1589 = vmatpush1.msra.mxu0 %v638
    %1590 = vmatprep.subr.mxu0 0.0
    %1591 = vmatpush1.msra.mxu0 %v641
    %1592 = vmatprep.subr.mxu0 0.0
    %1593 = vmatpush1.msra.mxu0 %v644
    %1594 = vmatprep.subr.mxu0 0.0
    %1595 = vmatpush1.msra.mxu0 %v647
    %1596 = vmatprep.subr.mxu0 0.0
    %1597 = vmatpush1.msra.mxu0 %v650
    %1598 = vmatprep.subr.mxu0 0.0
    %1599 = vmatpush1.msra.mxu0 %v653
    %1600 = vmatprep.subr.mxu0 0.0
    %1601 = vmatpush1.msra.mxu0 %v656
    %1602 = vmatprep.subr.mxu0 0.0
    %1603 = vmatpush1.msra.mxu0 %v659
    %1604 = vmatprep.subr.mxu0 0.0
    %1605 = vmatpush1.msra.mxu0 %v662
    %1606 = vmatprep.subr.mxu0 0.0
    %1607 = vmatpush1.msra.mxu0 0.0
    %1608 = vmatprep.subr.mxu0 0.0
    %1609 = vmatpush1.msra.mxu0 0.0
    %1610 = vmatprep.subr.mxu0 0.0
    %1611 = vmatpush1.msra.mxu0 0.0
    %1612 = vmatprep.subr.mxu0 0.0
    %1613 = vmatpush1.msra.mxu0 0.0
    %1614 = vmatprep.subr.mxu0 0.0
    %1615 = vmatpush1.msra.mxu0 0.0
    %1616 = vmatprep.subr.mxu0 0.0
    %1617 = vmatpush1.msra.mxu0 0.0
    %1618 = vmatprep.subr.mxu0 0.0
    %1619 = vmatpush1.msra.mxu0 0.0
    %1620 = vmatprep.subr.mxu0 0.0
    %1621 = vmatpush1.msra.mxu0 0.0
    %1622 = vmatprep.subr.mxu0 0.0
    %1623 = vmatpush1.msra.mxu0 0.0
    %1624 = vmatprep.subr.mxu0 0.0
    %1625 = vmatpush1.msra.mxu0 0.0
    %1626 = vmatprep.subr.mxu0 0.0
    %1627 = vmatpush1.msra.mxu0 0.0
    %1628 = vmatprep.subr.mxu0 0.0
    %1629 = vmatpush1.msra.mxu0 0.0
    %1630 = vmatprep.subr.mxu0 0.0
    %1631 = vmatpush1.msra.mxu0 0.0
    %1632 = vmatprep.subr.mxu0 0.0
    %1633 = vmatpush1.msra.mxu0 0.0
    %1634 = vmatprep.subr.mxu0 0.0
    %1635 = vmatpush1.msra.mxu0 0.0
    %1636 = vmatprep.subr.mxu0 0.0
    %1637 = vmatpush1.msra.mxu0 0.0
    %1638 = vmatprep.mubr.f32.mxu0 0.0
    %1639 = vmatmul.mubr.f32.gmra.mrb[0].mxu0 %v1498
    %v1640 = vpop.f32.mrb[0].mxu0
    %v1641 = vadd.f32 0.0, %v1640
    %v1642 = vpop.f32.mrb[0].mxu0
    %1643 = vdwg.mxu0
    %v1644 = vadd.f32 %v1500, %v1570
    %v1645 = vadd.f32 %v1501, %v1572
    %v1646 = vxor.u32 %v1644, 2147483648
    %v1647 = vxor.u32 %v1645, 2147483648
    %v1648 = vmul.f32 %v1646, 1.442695
    %v1649 = vpow.pop %v1648
    %v1650 = vmul.f32 %v1647, 1.442695
    %v1651 = vpow.pop %v1650
    %v1652 = vadd.f32 %v1649, 1.0
    %v1653 = vadd.f32 %v1651, 1.0
    %v1654 = vrcp.pop %v1652
    %v1655 = vmul.f32 1.0, %v1654
    %v1656 = vrcp.pop %v1653
    %v1657 = vmul.f32 1.0, %v1656
    %v1658 = vadd.f32 %v1641, %v826
    %v1659 = vmul.f32 %v1655, %v1658
    %v1660 = vadd.f32 %v1502, %v1659
    %v1661 = vtanh.pop %v1660
    %v1662 = vsub.f32 %v1498, %v1661
    %v1663 = vmul.f32 %v1657, %v1662
    %v1664 = vadd.f32 %v1661, %v1663
    %s1665 = scalar_lea.vmem [#allocation2], 144
    %v1666 = vld [vmem:[%s1665] sm:$0xff]
    %v1667 = vld [vmem:[%s1665 + $0x8] sm:$0xff]
    %v1668 = vld [vmem:[%s1665 + $0x10] sm:$0xff]
    %1669 = vmatprep.subr.mxu0 %v616
    %1670 = vmatpush1.msra.mxu0 %v615
    %1671 = vmatprep.subr.mxu0 %v619
    %1672 = vmatpush1.msra.mxu0 %v618
    %1673 = vmatprep.subr.mxu0 %v622
    %1674 = vmatpush1.msra.mxu0 %v621
    %1675 = vmatprep.subr.mxu0 %v625
    %1676 = vmatpush1.msra.mxu0 %v624
    %1677 = vmatprep.subr.mxu0 %v628
    %1678 = vmatpush1.msra.mxu0 %v627
    %1679 = vmatprep.subr.mxu0 %v631
    %1680 = vmatpush1.msra.mxu0 %v630
    %1681 = vmatprep.subr.mxu0 %v634
    %1682 = vmatpush1.msra.mxu0 %v633
    %1683 = vmatprep.subr.mxu0 %v637
    %1684 = vmatpush1.msra.mxu0 %v636
    %1685 = vmatprep.subr.mxu0 %v640
    %1686 = vmatpush1.msra.mxu0 %v639
    %1687 = vmatprep.subr.mxu0 %v643
    %1688 = vmatpush1.msra.mxu0 %v642
    %1689 = vmatprep.subr.mxu0 %v646
    %1690 = vmatpush1.msra.mxu0 %v645
    %1691 = vmatprep.subr.mxu0 %v649
    %1692 = vmatpush1.msra.mxu0 %v648
    %1693 = vmatprep.subr.mxu0 %v652
    %1694 = vmatpush1.msra.mxu0 %v651
    %1695 = vmatprep.subr.mxu0 %v655
    %1696 = vmatpush1.msra.mxu0 %v654
    %1697 = vmatprep.subr.mxu0 %v658
    %1698 = vmatpush1.msra.mxu0 %v657
    %1699 = vmatprep.subr.mxu0 %v661
    %1700 = vmatpush1.msra.mxu0 %v660
    %1701 = vmatprep.subr.mxu0 0.0
    %1702 = vmatpush1.msra.mxu0 0.0
    %1703 = vmatprep.subr.mxu0 0.0
    %1704 = vmatpush1.msra.mxu0 0.0
    %1705 = vmatprep.subr.mxu0 0.0
    %1706 = vmatpush1.msra.mxu0 0.0
    %1707 = vmatprep.subr.mxu0 0.0
    %1708 = vmatpush1.msra.mxu0 0.0
    %1709 = vmatprep.subr.mxu0 0.0
    %1710 = vmatpush1.msra.mxu0 0.0
    %1711 = vmatprep.subr.mxu0 0.0
    %1712 = vmatpush1.msra.mxu0 0.0
    %1713 = vmatprep.subr.mxu0 0.0
    %1714 = vmatpush1.msra.mxu0 0.0
    %1715 = vmatprep.subr.mxu0 0.0
    %1716 = vmatpush1.msra.mxu0 0.0
    %1717 = vmatprep.subr.mxu0 0.0
    %1718 = vmatpush1.msra.mxu0 0.0
    %1719 = vmatprep.subr.mxu0 0.0
    %1720 = vmatpush1.msra.mxu0 0.0
    %1721 = vmatprep.subr.mxu0 0.0
    %1722 = vmatpush1.msra.mxu0 0.0
    %1723 = vmatprep.subr.mxu0 0.0
    %1724 = vmatpush1.msra.mxu0 0.0
    %1725 = vmatprep.subr.mxu0 0.0
    %1726 = vmatpush1.msra.mxu0 0.0
    %1727 = vmatprep.subr.mxu0 0.0
    %1728 = vmatpush1.msra.mxu0 0.0
    %1729 = vmatprep.subr.mxu0 0.0
    %1730 = vmatpush1.msra.mxu0 0.0
    %1731 = vmatprep.subr.mxu0 0.0
    %1732 = vmatpush1.msra.mxu0 0.0
    %1733 = vmatprep.mubr.f32.mxu0 0.0
    %1734 = vmatmul.mubr.f32.gmra.mrb[0].mxu0 %v1664
    %v1735 = vpop.f32.mrb[0].mxu0
    %v1736 = vadd.f32 0.0, %v1735
    %v1737 = vpop.f32.mrb[0].mxu0
    %v1738 = vadd.f32 0.0, %v1737
    %1739 = vdwg.mxu0
    %1740 = vmatprep.subr.mxu0 0.0
    %1741 = vmatpush1.msra.mxu0 %v617
    %1742 = vmatprep.subr.mxu0 0.0
    %1743 = vmatpush1.msra.mxu0 %v620
    %1744 = vmatprep.subr.mxu0 0.0
    %1745 = vmatpush1.msra.mxu0 %v623
    %1746 = vmatprep.subr.mxu0 0.0
    %1747 = vmatpush1.msra.mxu0 %v626
    %1748 = vmatprep.subr.mxu0 0.0
    %1749 = vmatpush1.msra.mxu0 %v629
    %1750 = vmatprep.subr.mxu0 0.0
    %1751 = vmatpush1.msra.mxu0 %v632
    %1752 = vmatprep.subr.mxu0 0.0
    %1753 = vmatpush1.msra.mxu0 %v635
    %1754 = vmatprep.subr.mxu0 0.0
    %1755 = vmatpush1.msra.mxu0 %v638
    %1756 = vmatprep.subr.mxu0 0.0
    %1757 = vmatpush1.msra.mxu0 %v641
    %1758 = vmatprep.subr.mxu0 0.0
    %1759 = vmatpush1.msra.mxu0 %v644
    %1760 = vmatprep.subr.mxu0 0.0
    %1761 = vmatpush1.msra.mxu0 %v647
    %1762 = vmatprep.subr.mxu0 0.0
    %1763 = vmatpush1.msra.mxu0 %v650
    %1764 = vmatprep.subr.mxu0 0.0
    %1765 = vmatpush1.msra.mxu0 %v653
    %1766 = vmatprep.subr.mxu0 0.0
    %1767 = vmatpush1.msra.mxu0 %v656
    %1768 = vmatprep.subr.mxu0 0.0
    %1769 = vmatpush1.msra.mxu0 %v659
    %1770 = vmatprep.subr.mxu0 0.0
    %1771 = vmatpush1.msra.mxu0 %v662
    %1772 = vmatprep.subr.mxu0 0.0
    %1773 = vmatpush1.msra.mxu0 0.0
    %1774 = vmatprep.subr.mxu0 0.0
    %1775 = vmatpush1.msra.mxu0 0.0
    %1776 = vmatprep.subr.mxu0 0.0
    %1777 = vmatpush1.msra.mxu0 0.0
    %1778 = vmatprep.subr.mxu0 0.0
    %1779 = vmatpush1.msra.mxu0 0.0
    %1780 = vmatprep.subr.mxu0 0.0
    %1781 = vmatpush1.msra.mxu0 0.0
    %1782 = vmatprep.subr.mxu0 0.0
    %1783 = vmatpush1.msra.mxu0 0.0
    %1784 = vmatprep.subr.mxu0 0.0
    %1785 = vmatpush1.msra.mxu0 0.0
    %1786 = vmatprep.subr.mxu0 0.0
    %1787 = vmatpush1.msra.mxu0 0.0
    %1788 = vmatprep.subr.mxu0 0.0
    %1789 = vmatpush1.msra.mxu0 0.0
    %1790 = vmatprep.subr.mxu0 0.0
    %1791 = vmatpush1.msra.mxu0 0.0
    %1792 = vmatprep.subr.mxu0 0.0
    %1793 = vmatpush1.msra.mxu0 0.0
    %1794 = vmatprep.subr.mxu0 0.0
    %1795 = vmatpush1.msra.mxu0 0.0
    %1796 = vmatprep.subr.mxu0 0.0
    %1797 = vmatpush1.msra.mxu0 0.0
    %1798 = vmatprep.subr.mxu0 0.0
    %1799 = vmatpush1.msra.mxu0 0.0
    %1800 = vmatprep.subr.mxu0 0.0
    %1801 = vmatpush1.msra.mxu0 0.0
    %1802 = vmatprep.subr.mxu0 0.0
    %1803 = vmatpush1.msra.mxu0 0.0
    %1804 = vmatprep.mubr.f32.mxu0 0.0
    %1805 = vmatmul.mubr.f32.gmra.mrb[0].mxu0 %v1664
    %v1806 = vpop.f32.mrb[0].mxu0
    %v1807 = vadd.f32 0.0, %v1806
    %v1808 = vpop.f32.mrb[0].mxu0
    %1809 = vdwg.mxu0
    %v1810 = vadd.f32 %v1666, %v1736
    %v1811 = vadd.f32 %v1667, %v1738
    %v1812 = vxor.u32 %v1810, 2147483648
    %v1813 = vxor.u32 %v1811, 2147483648
    %v1814 = vmul.f32 %v1812, 1.442695
    %v1815 = vpow.pop %v1814
    %v1816 = vmul.f32 %v1813, 1.442695
    %v1817 = vpow.pop %v1816
    %v1818 = vadd.f32 %v1815, 1.0
    %v1819 = vadd.f32 %v1817, 1.0
    %v1820 = vrcp.pop %v1818
    %v1821 = vmul.f32 1.0, %v1820
    %v1822 = vrcp.pop %v1819
    %v1823 = vmul.f32 1.0, %v1822
    %v1824 = vadd.f32 %v1807, %v826
    %v1825 = vmul.f32 %v1821, %v1824
    %v1826 = vadd.f32 %v1668, %v1825
    %v1827 = vtanh.pop %v1826
    %v1828 = vsub.f32 %v1664, %v1827
    %v1829 = vmul.f32 %v1823, %v1828
    %v1830 = vadd.f32 %v1827, %v1829
    %s1831 = scalar_lea.vmem [#allocation2], 168
    %v1832 = vld [vmem:[%s1831] sm:$0xff]
    %v1833 = vld [vmem:[%s1831 + $0x8] sm:$0xff]
    %v1834 = vld [vmem:[%s1831 + $0x10] sm:$0xff]
    %1835 = vmatprep.subr.mxu0 %v616
    %1836 = vmatpush1.msra.mxu0 %v615
    %1837 = vmatprep.subr.mxu0 %v619
    %1838 = vmatpush1.msra.mxu0 %v618
    %1839 = vmatprep.subr.mxu0 %v622
    %1840 = vmatpush1.msra.mxu0 %v621
    %1841 = vmatprep.subr.mxu0 %v625
    %1842 = vmatpush1.msra.mxu0 %v624
    %1843 = vmatprep.subr.mxu0 %v628
    %1844 = vmatpush1.msra.mxu0 %v627
    %1845 = vmatprep.subr.mxu0 %v631
    %1846 = vmatpush1.msra.mxu0 %v630
    %1847 = vmatprep.subr.mxu0 %v634
    %1848 = vmatpush1.msra.mxu0 %v633
    %1849 = vmatprep.subr.mxu0 %v637
    %1850 = vmatpush1.msra.mxu0 %v636
    %1851 = vmatprep.subr.mxu0 %v640
    %1852 = vmatpush1.msra.mxu0 %v639
    %1853 = vmatprep.subr.mxu0 %v643
    %1854 = vmatpush1.msra.mxu0 %v642
    %1855 = vmatprep.subr.mxu0 %v646
    %1856 = vmatpush1.msra.mxu0 %v645
    %1857 = vmatprep.subr.mxu0 %v649
    %1858 = vmatpush1.msra.mxu0 %v648
    %1859 = vmatprep.subr.mxu0 %v652
    %1860 = vmatpush1.msra.mxu0 %v651
    %1861 = vmatprep.subr.mxu0 %v655
    %1862 = vmatpush1.msra.mxu0 %v654
    %1863 = vmatprep.subr.mxu0 %v658
    %1864 = vmatpush1.msra.mxu0 %v657
    %1865 = vmatprep.subr.mxu0 %v661
    %1866 = vmatpush1.msra.mxu0 %v660
    %1867 = vmatprep.subr.mxu0 0.0
    %1868 = vmatpush1.msra.mxu0 0.0
    %1869 = vmatprep.subr.mxu0 0.0
    %1870 = vmatpush1.msra.mxu0 0.0
    %1871 = vmatprep.subr.mxu0 0.0
    %1872 = vmatpush1.msra.mxu0 0.0
    %1873 = vmatprep.subr.mxu0 0.0
    %1874 = vmatpush1.msra.mxu0 0.0
    %1875 = vmatprep.subr.mxu0 0.0
    %1876 = vmatpush1.msra.mxu0 0.0
    %1877 = vmatprep.subr.mxu0 0.0
    %1878 = vmatpush1.msra.mxu0 0.0
    %1879 = vmatprep.subr.mxu0 0.0
    %1880 = vmatpush1.msra.mxu0 0.0
    %1881 = vmatprep.subr.mxu0 0.0
    %1882 = vmatpush1.msra.mxu0 0.0
    %1883 = vmatprep.subr.mxu0 0.0
    %1884 = vmatpush1.msra.mxu0 0.0
    %1885 = vmatprep.subr.mxu0 0.0
    %1886 = vmatpush1.msra.mxu0 0.0
    %1887 = vmatprep.subr.mxu0 0.0
    %1888 = vmatpush1.msra.mxu0 0.0
    %1889 = vmatprep.subr.mxu0 0.0
    %1890 = vmatpush1.msra.mxu0 0.0
    %1891 = vmatprep.subr.mxu0 0.0
    %1892 = vmatpush1.msra.mxu0 0.0
    %1893 = vmatprep.subr.mxu0 0.0
    %1894 = vmatpush1.msra.mxu0 0.0
    %1895 = vmatprep.subr.mxu0 0.0
    %1896 = vmatpush1.msra.mxu0 0.0
    %1897 = vmatprep.subr.mxu0 0.0
    %1898 = vmatpush1.msra.mxu0 0.0
    %1899 = vmatprep.mubr.f32.mxu0 0.0
    %1900 = vmatmul.mubr.f32.gmra.mrb[0].mxu0 %v1830
    %v1901 = vpop.f32.mrb[0].mxu0
    %v1902 = vadd.f32 0.0, %v1901
    %v1903 = vpop.f32.mrb[0].mxu0
    %v1904 = vadd.f32 0.0, %v1903
    %1905 = vdwg.mxu0
    %1906 = vmatprep.subr.mxu0 0.0
    %1907 = vmatpush1.msra.mxu0 %v617
    %1908 = vmatprep.subr.mxu0 0.0
    %1909 = vmatpush1.msra.mxu0 %v620
    %1910 = vmatprep.subr.mxu0 0.0
    %1911 = vmatpush1.msra.mxu0 %v623
    %1912 = vmatprep.subr.mxu0 0.0
    %1913 = vmatpush1.msra.mxu0 %v626
    %1914 = vmatprep.subr.mxu0 0.0
    %1915 = vmatpush1.msra.mxu0 %v629
    %1916 = vmatprep.subr.mxu0 0.0
    %1917 = vmatpush1.msra.mxu0 %v632
    %1918 = vmatprep.subr.mxu0 0.0
    %1919 = vmatpush1.msra.mxu0 %v635
    %1920 = vmatprep.subr.mxu0 0.0
    %1921 = vmatpush1.msra.mxu0 %v638
    %1922 = vmatprep.subr.mxu0 0.0
    %1923 = vmatpush1.msra.mxu0 %v641
    %1924 = vmatprep.subr.mxu0 0.0
    %1925 = vmatpush1.msra.mxu0 %v644
    %1926 = vmatprep.subr.mxu0 0.0
    %1927 = vmatpush1.msra.mxu0 %v647
    %1928 = vmatprep.subr.mxu0 0.0
    %1929 = vmatpush1.msra.mxu0 %v650
    %1930 = vmatprep.subr.mxu0 0.0
    %1931 = vmatpush1.msra.mxu0 %v653
    %1932 = vmatprep.subr.mxu0 0.0
    %1933 = vmatpush1.msra.mxu0 %v656
    %1934 = vmatprep.subr.mxu0 0.0
    %1935 = vmatpush1.msra.mxu0 %v659
    %1936 = vmatprep.subr.mxu0 0.0
    %1937 = vmatpush1.msra.mxu0 %v662
    %1938 = vmatprep.subr.mxu0 0.0
    %1939 = vmatpush1.msra.mxu0 0.0
    %1940 = vmatprep.subr.mxu0 0.0
    %1941 = vmatpush1.msra.mxu0 0.0
    %1942 = vmatprep.subr.mxu0 0.0
    %1943 = vmatpush1.msra.mxu0 0.0
    %1944 = vmatprep.subr.mxu0 0.0
    %1945 = vmatpush1.msra.mxu0 0.0
    %1946 = vmatprep.subr.mxu0 0.0
    %1947 = vmatpush1.msra.mxu0 0.0
    %1948 = vmatprep.subr.mxu0 0.0
    %1949 = vmatpush1.msra.mxu0 0.0
    %1950 = vmatprep.subr.mxu0 0.0
    %1951 = vmatpush1.msra.mxu0 0.0
    %1952 = vmatprep.subr.mxu0 0.0
    %1953 = vmatpush1.msra.mxu0 0.0
    %1954 = vmatprep.subr.mxu0 0.0
    %1955 = vmatpush1.msra.mxu0 0.0
    %1956 = vmatprep.subr.mxu0 0.0
    %1957 = vmatpush1.msra.mxu0 0.0
    %1958 = vmatprep.subr.mxu0 0.0
    %1959 = vmatpush1.msra.mxu0 0.0
    %1960 = vmatprep.subr.mxu0 0.0
    %1961 = vmatpush1.msra.mxu0 0.0
    %1962 = vmatprep.subr.mxu0 0.0
    %1963 = vmatpush1.msra.mxu0 0.0
    %1964 = vmatprep.subr.mxu0 0.0
    %1965 = vmatpush1.msra.mxu0 0.0
    %1966 = vmatprep.subr.mxu0 0.0
    %1967 = vmatpush1.msra.mxu0 0.0
    %1968 = vmatprep.subr.mxu0 0.0
    %1969 = vmatpush1.msra.mxu0 0.0
    %1970 = vmatprep.mubr.f32.mxu0 0.0
    %1971 = vmatmul.mubr.f32.gmra.mrb[0].mxu0 %v1830
    %v1972 = vpop.f32.mrb[0].mxu0
    %v1973 = vadd.f32 0.0, %v1972
    %v1974 = vpop.f32.mrb[0].mxu0
    %1975 = vdwg.mxu0
    %v1976 = vadd.f32 %v1832, %v1902
    %v1977 = vadd.f32 %v1833, %v1904
    %v1978 = vxor.u32 %v1976, 2147483648
    %v1979 = vxor.u32 %v1977, 2147483648
    %v1980 = vmul.f32 %v1978, 1.442695
    %v1981 = vpow.pop %v1980
    %v1982 = vmul.f32 %v1979, 1.442695
    %v1983 = vpow.pop %v1982
    %v1984 = vadd.f32 %v1981, 1.0
    %v1985 = vadd.f32 %v1983, 1.0
    %v1986 = vrcp.pop %v1984
    %v1987 = vmul.f32 1.0, %v1986
    %v1988 = vrcp.pop %v1985
    %v1989 = vmul.f32 1.0, %v1988
    %v1990 = vadd.f32 %v1973, %v826
    %v1991 = vmul.f32 %v1987, %v1990
    %v1992 = vadd.f32 %v1834, %v1991
    %v1993 = vtanh.pop %v1992
    %v1994 = vsub.f32 %v1830, %v1993
    %v1995 = vmul.f32 %v1989, %v1994
    %v1996 = vadd.f32 %v1993, %v1995
    %v1997 = vld [vmem:[%s7] sm:$0xff]
    %v1998 = vld [vmem:[%s7 + $0x8] sm:$0xff]
    %v1999 = vld [vmem:[%s7 + $0x10] sm:$0xff]
    %v2000 = vld [vmem:[%s7 + $0x18] sm:$0xff]
    %v2001 = vld [vmem:[%s7 + $0x20] sm:$0xff]
    %v2002 = vld [vmem:[%s7 + $0x28] sm:$0xff]
    %v2003 = vld [vmem:[%s7 + $0x30] sm:$0xff]
    %v2004 = vld [vmem:[%s7 + $0x38] sm:$0xff]
    %v2005 = vld [vmem:[%s7 + $0x40] sm:$0xff]
    %v2006 = vld [vmem:[%s7 + $0x48] sm:$0xff]
    %v2007 = vld [vmem:[%s7 + $0x50] sm:$0xff]
    %v2008 = vld [vmem:[%s7 + $0x58] sm:$0xff]
    %v2009 = vld [vmem:[%s7 + $0x60] sm:$0xff]
    %v2010 = vld [vmem:[%s7 + $0x68] sm:$0xff]
    %v2011 = vld [vmem:[%s7 + $0x70] sm:$0xff]
    %v2012 = vld [vmem:[%s7 + $0x78] sm:$0xff]
    %v2013 = vld [vmem:[%s8] sm:$0x1]
    %v2015 = vlaneseq
    %v2016 = vshrl.u32 %v2015, 7
    %v2017 = vsub.s32 0, %v2016
    %v2018 = vrot.slane %v2013, %v2017
    %2020 = vmatprep.subr.mxu0 0.0
    %2021 = vmatpush1.msra.mxu0 %v1997
    %2022 = vmatprep.subr.mxu0 0.0
    %2023 = vmatpush1.msra.mxu0 %v1998
    %2024 = vmatprep.subr.mxu0 0.0
    %2025 = vmatpush1.msra.mxu0 %v1999
    %2026 = vmatprep.subr.mxu0 0.0
    %2027 = vmatpush1.msra.mxu0 %v2000
    %2028 = vmatprep.subr.mxu0 0.0
    %2029 = vmatpush1.msra.mxu0 %v2001
    %2030 = vmatprep.subr.mxu0 0.0
    %2031 = vmatpush1.msra.mxu0 %v2002
    %2032 = vmatprep.subr.mxu0 0.0
    %2033 = vmatpush1.msra.mxu0 %v2003
    %2034 = vmatprep.subr.mxu0 0.0
    %2035 = vmatpush1.msra.mxu0 %v2004
    %2036 = vmatprep.subr.mxu0 0.0
    %2037 = vmatpush1.msra.mxu0 %v2005
    %2038 = vmatprep.subr.mxu0 0.0
    %2039 = vmatpush1.msra.mxu0 %v2006
    %2040 = vmatprep.subr.mxu0 0.0
    %2041 = vmatpush1.msra.mxu0 %v2007
    %2042 = vmatprep.subr.mxu0 0.0
    %2043 = vmatpush1.msra.mxu0 %v2008
    %2044 = vmatprep.subr.mxu0 0.0
    %2045 = vmatpush1.msra.mxu0 %v2009
    %2046 = vmatprep.subr.mxu0 0.0
    %2047 = vmatpush1.msra.mxu0 %v2010
    %2048 = vmatprep.subr.mxu0 0.0
    %2049 = vmatpush1.msra.mxu0 %v2011
    %2050 = vmatprep.subr.mxu0 0.0
    %2051 = vmatpush1.msra.mxu0 %v2012
    %2052 = vmatprep.subr.mxu0 0.0
    %2053 = vmatpush1.msra.mxu0 0.0
    %2054 = vmatprep.subr.mxu0 0.0
    %2055 = vmatpush1.msra.mxu0 0.0
    %2056 = vmatprep.subr.mxu0 0.0
    %2057 = vmatpush1.msra.mxu0 0.0
    %2058 = vmatprep.subr.mxu0 0.0
    %2059 = vmatpush1.msra.mxu0 0.0
    %2060 = vmatprep.subr.mxu0 0.0
    %2061 = vmatpush1.msra.mxu0 0.0
    %2062 = vmatprep.subr.mxu0 0.0
    %2063 = vmatpush1.msra.mxu0 0.0
    %2064 = vmatprep.subr.mxu0 0.0
    %2065 = vmatpush1.msra.mxu0 0.0
    %2066 = vmatprep.subr.mxu0 0.0
    %2067 = vmatpush1.msra.mxu0 0.0
    %2068 = vmatprep.subr.mxu0 0.0
    %2069 = vmatpush1.msra.mxu0 0.0
    %2070 = vmatprep.subr.mxu0 0.0
    %2071 = vmatpush1.msra.mxu0 0.0
    %2072 = vmatprep.subr.mxu0 0.0
    %2073 = vmatpush1.msra.mxu0 0.0
    %2074 = vmatprep.subr.mxu0 0.0
    %2075 = vmatpush1.msra.mxu0 0.0
    %2076 = vmatprep.subr.mxu0 0.0
    %2077 = vmatpush1.msra.mxu0 0.0
    %2078 = vmatprep.subr.mxu0 0.0
    %2079 = vmatpush1.msra.mxu0 0.0
    %2080 = vmatprep.subr.mxu0 0.0
    %2081 = vmatpush1.msra.mxu0 0.0
    %2082 = vmatprep.subr.mxu0 0.0
    %2083 = vmatpush1.msra.mxu0 0.0
    %2084 = vmatprep.mubr.f32.mxu0 0.0
    %2085 = vmatmul.mubr.f32.gmra.mrb[0].mxu0 %v1996
    %v2086 = vpop.f32.mrb[0].mxu0
    %v2087 = vadd.f32 %v2018, %v2086
    %v2088 = vpop.f32.mrb[0].mxu0
    %2089 = vdwg.mxu0
    %2090 = vst [vmem:[#allocation8] sm:$0xff] %v2087
    // Predicated region
    $region46: #{tpu_custom_call.1} parent=1 // pred_check
      _
    $region47: #{tpu_custom_call.1} parent=1 // pred_check_branch
      %2092 = sbr.rel (0) target = $region49
    $region48: #{tpu_custom_call.1} parent=1 // pred_region
      %s2094 = ssub.s32 128, 128
      %2095 = vsyncadd [#allocation5], %s2094
      %s2097 = sshll.u32 [#allocation8], 4
      %s2098 = int_to_ptr.vmem [resolvable:$true] %s2097
      %2100 = dma.vmem_to_hbm [thread:$0]  %s2098, 128, %s9, [#allocation5]
    $region49: #{tpu_custom_call.1} parent=1 // pred_fallthru
      _
    // Predicated region
    $region50: #{tpu_custom_call.1} parent=1 // pred_check
      _
    $region51: #{tpu_custom_call.1} parent=1 // pred_check_branch
      %2102 = sbr.rel (0) target = $region53
    $region52: #{tpu_custom_call.1} parent=1 // pred_region
      %2103 = dma.done [#allocation5], 128
    $region53: #{tpu_custom_call.1} parent=1 // pred_fallthru
      _
    %2104 = vsyncpa [#allocation4], 1
    %2105 = vsyncpa [#allocation7], 1
    %2106 = vsyncpa [#allocation5], 1

</llo_original>
